<compile_context>
chip_gen: v7x
topology: tpu7x:2x2x1
jax: 0.10.0
libtpu: 0.0.40
codegen_flags: <defaults>
</compile_context>

<pallas_src>
import functools

import jax
import jax.numpy as jnp
from jax.experimental import pallas as pl
from jax.experimental.pallas import tpu as pltpu


# ----------------------------------------------------------------------------
# In-kernel helper
# ----------------------------------------------------------------------------
def _frn(y, gamma, beta, tau, eps):
    """FilterResponseNormalization on a (HW, C) fp32 tile.

    nu2 = mean(y^2) over the spatial axis per channel; the grid iterates over
    batch, so this matches torch's mean(dim=(2, 3), keepdim=True).
    """
    nu2 = jnp.mean(y * y, axis=0, keepdims=True)            # (1, C)
    y = y * jax.lax.rsqrt(nu2 + jnp.abs(eps))                # eps is (1, 1)
    return jnp.maximum(gamma * y + beta, tau)                # TLU (no extra ReLU)


# ----------------------------------------------------------------------------
# Fused SepConvBlock kernel (one batch element per grid step)
# ----------------------------------------------------------------------------
def sep_conv_block_kernel(x_ref, wdw_ref, g1_ref, b1_ref, t1_ref, e1_ref,
                          wpw_ref, g2_ref, b2_ref, t2_ref, e2_ref,
                          o_ref, xp_ref,
                          *, H, W, K, pad, Ho, Wo):
    cin = x_ref.shape[-1]

    # ---- ReLU on the block input -------------------------------------------
    x = jnp.maximum(x_ref[0].astype(jnp.float32), 0.0)       # (H, W, Cin)

    # ---- zero-padded copy into VMEM scratch (in-kernel "same" padding) -----
    if pad > 0:
        xp_ref[...] = jnp.zeros_like(xp_ref)
        xp_ref[pad:pad + H, pad:pad + W, :] = x
    else:
        xp_ref[...] = x

    # ---- depthwise KxK conv, stride 1 (per-channel multiply-add, VPU) ------
    # TODO(synk): stride > 1 not implemented (module default is stride=1).
    wdw = wdw_ref[...].astype(jnp.float32)                    # (K*K, Cin)
    acc = jnp.zeros((Ho, Wo, cin), jnp.float32)
    for ky in range(K):
        for kx in range(K):
            idx = ky * K + kx
            w_tap = wdw[idx:idx + 1, :].reshape(1, 1, cin)    # (1, 1, Cin)
            acc = acc + xp_ref[ky:ky + Ho, kx:kx + Wo, :] * w_tap

    # ---- FRN over depthwise output (inplanes channels) ---------------------
    y = _frn(acc.reshape(Ho * Wo, cin),
             g1_ref[...], b1_ref[...], t1_ref[...], e1_ref[...])

    # ---- pointwise 1x1 conv: bf16 MXU operands, f32 accumulation -----------
    z = jnp.dot(y.astype(jnp.bfloat16), wpw_ref[...],
                preferred_element_type=jnp.float32)           # (HoWo, Cout)

    # ---- FRN over pointwise output (planes channels) -----------------------
    z = _frn(z, g2_ref[...], b2_ref[...], t2_ref[...], e2_ref[...])

    o_ref[0] = z.reshape(Ho, Wo, -1).astype(o_ref.dtype)


# ----------------------------------------------------------------------------
# Wrapper (NCHW in / NCHW out, matching the PyTorch module)
# ----------------------------------------------------------------------------
def sep_conv_block(x_nchw, params, *, kernel_size=3, stride=1, padding=1):
    assert stride == 1, "stride > 1 not supported"            # module default is 1
    x = jnp.transpose(x_nchw, (0, 2, 3, 1))                   # NCHW -> NHWC
    N, H, W, Cin = x.shape
    K, pad = kernel_size, padding
    Ho = H + 2 * pad - K + 1
    Wo = W + 2 * pad - K + 1

    w_pw = params["w_pw"].astype(jnp.bfloat16)                # cast once, halve DMA
    Cout = w_pw.shape[1]

    kernel = functools.partial(sep_conv_block_kernel,
                               H=H, W=W, K=K, pad=pad, Ho=Ho, Wo=Wo)

    out = pl.pallas_call(
        kernel,
        out_shape=jax.ShapeDtypeStruct((N, Ho, Wo, Cout), x_nchw.dtype),
        grid=(N,),
        in_specs=[
            pl.BlockSpec((1, H, W, Cin), lambda n: (n, 0, 0, 0)),   # x
            pl.BlockSpec((K * K, Cin), lambda n: (0, 0)),           # depthwise w
            pl.BlockSpec((1, Cin), lambda n: (0, 0)),               # gamma1
            pl.BlockSpec((1, Cin), lambda n: (0, 0)),               # beta1
            pl.BlockSpec((1, Cin), lambda n: (0, 0)),               # tau1
            pl.BlockSpec((1, 1), lambda n: (0, 0)),                 # eps1
            pl.BlockSpec((Cin, Cout), lambda n: (0, 0)),            # pointwise w (bf16)
            pl.BlockSpec((1, Cout), lambda n: (0, 0)),              # gamma2
            pl.BlockSpec((1, Cout), lambda n: (0, 0)),              # beta2
            pl.BlockSpec((1, Cout), lambda n: (0, 0)),              # tau2
            pl.BlockSpec((1, 1), lambda n: (0, 0)),                 # eps2
        ],
        out_specs=pl.BlockSpec((1, Ho, Wo, Cout), lambda n: (n, 0, 0, 0)),
        scratch_shapes=[pltpu.VMEM((H + 2 * pad, W + 2 * pad, Cin), jnp.float32)],
        compiler_params=pltpu.CompilerParams(dimension_semantics=("parallel",)),
    )(x, params["w_dw"], *params["frn1"], w_pw, *params["frn2"])

    return jnp.transpose(out, (0, 3, 1, 2))                   # NHWC -> NCHW


# ----------------------------------------------------------------------------
# Main
# ----------------------------------------------------------------------------
if __name__ == "__main__":
    N, Cin, Cout = 2, 128, 256        # SepConvBlock(inplanes=128, planes=256, ...)
    H = W = 16
    K, STRIDE, PAD = 3, 1, 1          # typical DeepLabV3+ usage: 3x3, same padding

    key = jax.random.PRNGKey(0)
    ks = jax.random.split(key, 4)

    # input (NCHW, as in PyTorch)
    x = jax.random.normal(ks[0], (N, Cin, H, W), jnp.float32)

    def frn_params(c):
        # FilterResponseNormalization.reset_parameters: gamma=1, beta=0, tau=0,
        # eps=1e-6 (non-learnable by default)
        return (jnp.ones((1, c), jnp.float32),
                jnp.zeros((1, c), jnp.float32),
                jnp.zeros((1, c), jnp.float32),
                jnp.full((1, 1), 1e-6, jnp.float32))

    params = {
        # torch depthwise weight (Cin, 1, K, K) -> (K*K, Cin)
        "w_dw": jax.random.normal(ks[1], (K * K, Cin), jnp.float32) * 0.1,
        "frn1": frn_params(Cin),
        # torch pointwise weight (Cout, Cin, 1, 1) -> (Cin, Cout)
        "w_pw": jax.random.normal(ks[2], (Cin, Cout), jnp.float32) * 0.05,
        "frn2": frn_params(Cout),
    }

    fwd = jax.jit(functools.partial(sep_conv_block,
                                    kernel_size=K, stride=STRIDE, padding=PAD))
    out = fwd(x, params)
    out = jax.block_until_ready(out)
    assert out.shape == (N, Cout, H, W), out.shape
    assert bool(jnp.all(jnp.isfinite(out)))
    print("KERNEL_OK")
</pallas_src>

<mosaic_0001>
module attributes {stable_mosaic.version = 11 : i64} {
  func.func @sep_conv_block_kernel(%arg0: i32, %arg1: memref<1x16x16x128xf32, #tpu.memory_space<vmem>>, %arg2: memref<9x128xf32, #tpu.memory_space<vmem>>, %arg3: memref<1x128xf32, #tpu.memory_space<vmem>>, %arg4: memref<1x128xf32, #tpu.memory_space<vmem>>, %arg5: memref<1x128xf32, #tpu.memory_space<vmem>>, %arg6: memref<1x1xf32, #tpu.memory_space<vmem>>, %arg7: memref<128x256xbf16, #tpu.memory_space<vmem>>, %arg8: memref<1x256xf32, #tpu.memory_space<vmem>>, %arg9: memref<1x256xf32, #tpu.memory_space<vmem>>, %arg10: memref<1x256xf32, #tpu.memory_space<vmem>>, %arg11: memref<1x1xf32, #tpu.memory_space<vmem>>, %arg12: memref<1x16x16x256xf32, #tpu.memory_space<vmem>>, %arg13: memref<18x18x128xf32, #tpu.memory_space<vmem>>) attributes {dimension_semantics = [#tpu.dimension_semantics<parallel>], iteration_bounds = array<i64: 2>, scalar_prefetch = 0 : i64, scratch_operands = 1 : i64, tpu.core_type = #tpu.core_type<tc>, window_params = [{transform_indices = @transform_0, window_bounds = array<i64: 1, 16, 16, 128>}, {pipeline_mode = #tpu.pipeline_mode<synchronous>, transform_indices = @transform_1, window_bounds = array<i64: 9, 128>}, {pipeline_mode = #tpu.pipeline_mode<synchronous>, transform_indices = @transform_2, window_bounds = array<i64: 1, 128>}, {pipeline_mode = #tpu.pipeline_mode<synchronous>, transform_indices = @transform_3, window_bounds = array<i64: 1, 128>}, {pipeline_mode = #tpu.pipeline_mode<synchronous>, transform_indices = @transform_4, window_bounds = array<i64: 1, 128>}, {pipeline_mode = #tpu.pipeline_mode<synchronous>, transform_indices = @transform_5, window_bounds = array<i64: 1, 1>}, {pipeline_mode = #tpu.pipeline_mode<synchronous>, transform_indices = @transform_6, window_bounds = array<i64: 128, 256>}, {pipeline_mode = #tpu.pipeline_mode<synchronous>, transform_indices = @transform_7, window_bounds = array<i64: 1, 256>}, {pipeline_mode = #tpu.pipeline_mode<synchronous>, transform_indices = @transform_8, window_bounds = array<i64: 1, 256>}, {pipeline_mode = #tpu.pipeline_mode<synchronous>, transform_indices = @transform_9, window_bounds = array<i64: 1, 256>}, {pipeline_mode = #tpu.pipeline_mode<synchronous>, transform_indices = @transform_10, window_bounds = array<i64: 1, 1>}, {transform_indices = @transform_11, window_bounds = array<i64: 1, 16, 16, 256>}]} {
    %c0 = arith.constant 0 : index
    %c0_0 = arith.constant 0 : index
    %c0_1 = arith.constant 0 : index
    %c0_2 = arith.constant 0 : index
    %0 = vector.load %arg1[%c0, %c0_0, %c0_1, %c0_2] : memref<1x16x16x128xf32, #tpu.memory_space<vmem>>, vector<1x16x16x128xf32>
    %1 = vector.shape_cast %0 : vector<1x16x16x128xf32> to vector<16x16x128xf32>
    %cst = arith.constant 0.000000e+00 : f32
    %2 = vector.broadcast %cst : f32 to vector<16x16x128xf32>
    %3 = arith.maximumf %1, %2 : vector<16x16x128xf32>
    %cst_3 = arith.constant 0.000000e+00 : f32
    %4 = vector.broadcast %cst_3 : f32 to vector<18x18x128xf32>
    %c0_4 = arith.constant 0 : index
    %c0_5 = arith.constant 0 : index
    %c0_6 = arith.constant 0 : index
    %5 = vector.load %arg13[%c0_4, %c0_5, %c0_6] : memref<18x18x128xf32, #tpu.memory_space<vmem>>, vector<18x18x128xf32>
    tpu.vector_store %arg13[%c0_4, %c0_5, %c0_6], %4 {strides = array<i32>} : memref<18x18x128xf32, #tpu.memory_space<vmem>>, vector<18x18x128xf32>,
    %c1 = arith.constant 1 : index
    %c1_7 = arith.constant 1 : index
    %c0_8 = arith.constant 0 : index
    %6 = vector.load %arg13[%c1, %c1_7, %c0_8] : memref<18x18x128xf32, #tpu.memory_space<vmem>>, vector<16x16x128xf32>
    tpu.vector_store %arg13[%c1, %c1_7, %c0_8], %3 {strides = array<i32>} : memref<18x18x128xf32, #tpu.memory_space<vmem>>, vector<16x16x128xf32>,
    %c0_9 = arith.constant 0 : index
    %c0_10 = arith.constant 0 : index
    %7 = vector.load %arg2[%c0_9, %c0_10] : memref<9x128xf32, #tpu.memory_space<vmem>>, vector<9x128xf32>
    %cst_11 = arith.constant 0.000000e+00 : f32
    %8 = vector.broadcast %cst_11 : f32 to vector<16x16x128xf32>
    %9 = vector.extract_strided_slice %7 {offsets = [0, 0], sizes = [1, 128], strides = [1, 1]} : vector<9x128xf32> to vector<1x128xf32>
    %10 = vector.shape_cast %9 : vector<1x128xf32> to vector<1x1x128xf32>
    %c0_12 = arith.constant 0 : index
    %c0_13 = arith.constant 0 : index
    %c0_14 = arith.constant 0 : index
    %11 = vector.load %arg13[%c0_12, %c0_13, %c0_14] : memref<18x18x128xf32, #tpu.memory_space<vmem>>, vector<16x16x128xf32>
    %12 = vector.broadcast %10 : vector<1x1x128xf32> to vector<16x16x128xf32>
    %13 = arith.mulf %11, %12 : vector<16x16x128xf32>
    %14 = arith.addf %8, %13 : vector<16x16x128xf32>
    %15 = vector.extract_strided_slice %7 {offsets = [1, 0], sizes = [1, 128], strides = [1, 1]} : vector<9x128xf32> to vector<1x128xf32>
    %16 = vector.shape_cast %15 : vector<1x128xf32> to vector<1x1x128xf32>
    %c0_15 = arith.constant 0 : index
    %c1_16 = arith.constant 1 : index
    %c0_17 = arith.constant 0 : index
    %17 = vector.load %arg13[%c0_15, %c1_16, %c0_17] : memref<18x18x128xf32, #tpu.memory_space<vmem>>, vector<16x16x128xf32>
    %18 = vector.broadcast %16 : vector<1x1x128xf32> to vector<16x16x128xf32>
    %19 = arith.mulf %17, %18 : vector<16x16x128xf32>
    %20 = arith.addf %14, %19 : vector<16x16x128xf32>
    %21 = vector.extract_strided_slice %7 {offsets = [2, 0], sizes = [1, 128], strides = [1, 1]} : vector<9x128xf32> to vector<1x128xf32>
    %22 = vector.shape_cast %21 : vector<1x128xf32> to vector<1x1x128xf32>
    %c0_18 = arith.constant 0 : index
    %c2 = arith.constant 2 : index
    %c0_19 = arith.constant 0 : index
    %23 = vector.load %arg13[%c0_18, %c2, %c0_19] : memref<18x18x128xf32, #tpu.memory_space<vmem>>, vector<16x16x128xf32>
    %24 = vector.broadcast %22 : vector<1x1x128xf32> to vector<16x16x128xf32>
    %25 = arith.mulf %23, %24 : vector<16x16x128xf32>
    %26 = arith.addf %20, %25 : vector<16x16x128xf32>
    %27 = vector.extract_strided_slice %7 {offsets = [3, 0], sizes = [1, 128], strides = [1, 1]} : vector<9x128xf32> to vector<1x128xf32>
    %28 = vector.shape_cast %27 : vector<1x128xf32> to vector<1x1x128xf32>
    %c1_20 = arith.constant 1 : index
    %c0_21 = arith.constant 0 : index
    %c0_22 = arith.constant 0 : index
    %29 = vector.load %arg13[%c1_20, %c0_21, %c0_22] : memref<18x18x128xf32, #tpu.memory_space<vmem>>, vector<16x16x128xf32>
    %30 = vector.broadcast %28 : vector<1x1x128xf32> to vector<16x16x128xf32>
    %31 = arith.mulf %29, %30 : vector<16x16x128xf32>
    %32 = arith.addf %26, %31 : vector<16x16x128xf32>
    %33 = vector.extract_strided_slice %7 {offsets = [4, 0], sizes = [1, 128], strides = [1, 1]} : vector<9x128xf32> to vector<1x128xf32>
    %34 = vector.shape_cast %33 : vector<1x128xf32> to vector<1x1x128xf32>
    %c1_23 = arith.constant 1 : index
    %c1_24 = arith.constant 1 : index
    %c0_25 = arith.constant 0 : index
    %35 = vector.load %arg13[%c1_23, %c1_24, %c0_25] : memref<18x18x128xf32, #tpu.memory_space<vmem>>, vector<16x16x128xf32>
    %36 = vector.broadcast %34 : vector<1x1x128xf32> to vector<16x16x128xf32>
    %37 = arith.mulf %35, %36 : vector<16x16x128xf32>
    %38 = arith.addf %32, %37 : vector<16x16x128xf32>
    %39 = vector.extract_strided_slice %7 {offsets = [5, 0], sizes = [1, 128], strides = [1, 1]} : vector<9x128xf32> to vector<1x128xf32>
    %40 = vector.shape_cast %39 : vector<1x128xf32> to vector<1x1x128xf32>
    %c1_26 = arith.constant 1 : index
    %c2_27 = arith.constant 2 : index
    %c0_28 = arith.constant 0 : index
    %41 = vector.load %arg13[%c1_26, %c2_27, %c0_28] : memref<18x18x128xf32, #tpu.memory_space<vmem>>, vector<16x16x128xf32>
    %42 = vector.broadcast %40 : vector<1x1x128xf32> to vector<16x16x128xf32>
    %43 = arith.mulf %41, %42 : vector<16x16x128xf32>
    %44 = arith.addf %38, %43 : vector<16x16x128xf32>
    %45 = vector.extract_strided_slice %7 {offsets = [6, 0], sizes = [1, 128], strides = [1, 1]} : vector<9x128xf32> to vector<1x128xf32>
    %46 = vector.shape_cast %45 : vector<1x128xf32> to vector<1x1x128xf32>
    %c2_29 = arith.constant 2 : index
    %c0_30 = arith.constant 0 : index
    %c0_31 = arith.constant 0 : index
    %47 = vector.load %arg13[%c2_29, %c0_30, %c0_31] : memref<18x18x128xf32, #tpu.memory_space<vmem>>, vector<16x16x128xf32>
    %48 = vector.broadcast %46 : vector<1x1x128xf32> to vector<16x16x128xf32>
    %49 = arith.mulf %47, %48 : vector<16x16x128xf32>
    %50 = arith.addf %44, %49 : vector<16x16x128xf32>
    %51 = vector.extract_strided_slice %7 {offsets = [7, 0], sizes = [1, 128], strides = [1, 1]} : vector<9x128xf32> to vector<1x128xf32>
    %52 = vector.shape_cast %51 : vector<1x128xf32> to vector<1x1x128xf32>
    %c2_32 = arith.constant 2 : index
    %c1_33 = arith.constant 1 : index
    %c0_34 = arith.constant 0 : index
    %53 = vector.load %arg13[%c2_32, %c1_33, %c0_34] : memref<18x18x128xf32, #tpu.memory_space<vmem>>, vector<16x16x128xf32>
    %54 = vector.broadcast %52 : vector<1x1x128xf32> to vector<16x16x128xf32>
    %55 = arith.mulf %53, %54 : vector<16x16x128xf32>
    %56 = arith.addf %50, %55 : vector<16x16x128xf32>
    %57 = vector.extract_strided_slice %7 {offsets = [8, 0], sizes = [1, 128], strides = [1, 1]} : vector<9x128xf32> to vector<1x128xf32>
    %58 = vector.shape_cast %57 : vector<1x128xf32> to vector<1x1x128xf32>
    %c2_35 = arith.constant 2 : index
    %c2_36 = arith.constant 2 : index
    %c0_37 = arith.constant 0 : index
    %59 = vector.load %arg13[%c2_35, %c2_36, %c0_37] : memref<18x18x128xf32, #tpu.memory_space<vmem>>, vector<16x16x128xf32>
    %60 = vector.broadcast %58 : vector<1x1x128xf32> to vector<16x16x128xf32>
    %61 = arith.mulf %59, %60 : vector<16x16x128xf32>
    %62 = arith.addf %56, %61 : vector<16x16x128xf32>
    %63 = vector.shape_cast %62 : vector<16x16x128xf32> to vector<256x128xf32>
    %c0_38 = arith.constant 0 : index
    %c0_39 = arith.constant 0 : index
    %64 = vector.load %arg3[%c0_38, %c0_39] : memref<1x128xf32, #tpu.memory_space<vmem>>, vector<1x128xf32>
    %c0_40 = arith.constant 0 : index
    %c0_41 = arith.constant 0 : index
    %65 = vector.load %arg4[%c0_40, %c0_41] : memref<1x128xf32, #tpu.memory_space<vmem>>, vector<1x128xf32>
    %c0_42 = arith.constant 0 : index
    %c0_43 = arith.constant 0 : index
    %66 = vector.load %arg5[%c0_42, %c0_43] : memref<1x128xf32, #tpu.memory_space<vmem>>, vector<1x128xf32>
    %c0_44 = arith.constant 0 : index
    %c0_45 = arith.constant 0 : index
    %67 = vector.load %arg6[%c0_44, %c0_45] : memref<1x1xf32, #tpu.memory_space<vmem>>, vector<1x1xf32>
    %68 = arith.mulf %63, %63 : vector<256x128xf32>
    %cst_46 = arith.constant dense<0.000000e+00> : vector<128xf32>
    %69 = vector.multi_reduction <add>, %68, %cst_46 [0] : vector<256x128xf32> to vector<128xf32>
    %70 = vector.shape_cast %69 : vector<128xf32> to vector<1x128xf32>
    %cst_47 = arith.constant 2.560000e+02 : f32
    %71 = vector.broadcast %cst_47 : f32 to vector<1x128xf32>
    %72 = arith.divf %70, %71 : vector<1x128xf32>
    %73 = math.absf %67 : vector<1x1xf32>
    %74 = vector.broadcast %73 : vector<1x1xf32> to vector<1x128xf32>
    %75 = arith.addf %72, %74 : vector<1x128xf32>
    %76 = math.rsqrt %75 : vector<1x128xf32>
    %77 = vector.broadcast %76 : vector<1x128xf32> to vector<256x128xf32>
    %78 = arith.mulf %63, %77 : vector<256x128xf32>
    %79 = vector.broadcast %64 : vector<1x128xf32> to vector<256x128xf32>
    %80 = arith.mulf %79, %78 : vector<256x128xf32>
    %81 = vector.broadcast %65 : vector<1x128xf32> to vector<256x128xf32>
    %82 = arith.addf %80, %81 : vector<256x128xf32>
    %83 = vector.broadcast %66 : vector<1x128xf32> to vector<256x128xf32>
    %84 = arith.maximumf %82, %83 : vector<256x128xf32>
    %85 = arith.truncf %84 : vector<256x128xf32> to vector<256x128xbf16>
    %c0_48 = arith.constant 0 : index
    %c0_49 = arith.constant 0 : index
    %86 = vector.load %arg7[%c0_48, %c0_49] : memref<128x256xbf16, #tpu.memory_space<vmem>>, vector<128x256xbf16>
    %cst_50 = arith.constant dense<0.000000e+00> : vector<256x256xf32>
    %87 = tpu.matmul %85, %86, %cst_50 {dimension_numbers = #tpu.dot_dimension_numbers<[1], [0], [0], [1], [0, 0, 1, 1], [], []>} : vector<256x128xbf16>, vector<128x256xbf16>, vector<256x256xf32> -> vector<256x256xf32>
    %c0_51 = arith.constant 0 : index
    %c0_52 = arith.constant 0 : index
    %88 = vector.load %arg8[%c0_51, %c0_52] : memref<1x256xf32, #tpu.memory_space<vmem>>, vector<1x256xf32>
    %c0_53 = arith.constant 0 : index
    %c0_54 = arith.constant 0 : index
    %89 = vector.load %arg9[%c0_53, %c0_54] : memref<1x256xf32, #tpu.memory_space<vmem>>, vector<1x256xf32>
    %c0_55 = arith.constant 0 : index
    %c0_56 = arith.constant 0 : index
    %90 = vector.load %arg10[%c0_55, %c0_56] : memref<1x256xf32, #tpu.memory_space<vmem>>, vector<1x256xf32>
    %c0_57 = arith.constant 0 : index
    %c0_58 = arith.constant 0 : index
    %91 = vector.load %arg11[%c0_57, %c0_58] : memref<1x1xf32, #tpu.memory_space<vmem>>, vector<1x1xf32>
    %92 = arith.mulf %87, %87 : vector<256x256xf32>
    %cst_59 = arith.constant dense<0.000000e+00> : vector<256xf32>
    %93 = vector.multi_reduction <add>, %92, %cst_59 [0] : vector<256x256xf32> to vector<256xf32>
    %94 = vector.shape_cast %93 : vector<256xf32> to vector<1x256xf32>
    %cst_60 = arith.constant 2.560000e+02 : f32
    %95 = vector.broadcast %cst_60 : f32 to vector<1x256xf32>
    %96 = arith.divf %94, %95 : vector<1x256xf32>
    %97 = math.absf %91 : vector<1x1xf32>
    %98 = vector.broadcast %97 : vector<1x1xf32> to vector<1x256xf32>
    %99 = arith.addf %96, %98 : vector<1x256xf32>
    %100 = math.rsqrt %99 : vector<1x256xf32>
    %101 = vector.broadcast %100 : vector<1x256xf32> to vector<256x256xf32>
    %102 = arith.mulf %87, %101 : vector<256x256xf32>
    %103 = vector.broadcast %88 : vector<1x256xf32> to vector<256x256xf32>
    %104 = arith.mulf %103, %102 : vector<256x256xf32>
    %105 = vector.broadcast %89 : vector<1x256xf32> to vector<256x256xf32>
    %106 = arith.addf %104, %105 : vector<256x256xf32>
    %107 = vector.broadcast %90 : vector<1x256xf32> to vector<256x256xf32>
    %108 = arith.maximumf %106, %107 : vector<256x256xf32>
    %109 = vector.shape_cast %108 : vector<256x256xf32> to vector<16x16x256xf32>
    %c0_61 = arith.constant 0 : index
    %c0_62 = arith.constant 0 : index
    %c0_63 = arith.constant 0 : index
    %c0_64 = arith.constant 0 : index
    %110 = vector.load %arg12[%c0_61, %c0_62, %c0_63, %c0_64] : memref<1x16x16x256xf32, #tpu.memory_space<vmem>>, vector<1x16x16x256xf32>
    %111 = vector.shape_cast %110 : vector<1x16x16x256xf32> to vector<16x16x256xf32>
    %112 = vector.shape_cast %109 : vector<16x16x256xf32> to vector<1x16x16x256xf32>
    tpu.vector_store %arg12[%c0_61, %c0_62, %c0_63, %c0_64], %112 {strides = array<i32>} : memref<1x16x16x256xf32, #tpu.memory_space<vmem>>, vector<1x16x16x256xf32>,
    return
  }
  func.func @transform_0(%arg0: i32) -> (i32, i32, i32, i32) {
    %c0_i32 = arith.constant 0 : i32
    %c0_i32_0 = arith.constant 0 : i32
    %c0_i32_1 = arith.constant 0 : i32
    %c0_i32_2 = arith.constant 0 : i32
    return %arg0, %c0_i32, %c0_i32_0, %c0_i32_1 : i32, i32, i32, i32
  }
  func.func @transform_1(%arg0: i32) -> (i32, i32) {
    %c0_i32 = arith.constant 0 : i32
    %c0_i32_0 = arith.constant 0 : i32
    %c0_i32_1 = arith.constant 0 : i32
    return %c0_i32, %c0_i32_0 : i32, i32
  }
  func.func @transform_2(%arg0: i32) -> (i32, i32) {
    %c0_i32 = arith.constant 0 : i32
    %c0_i32_0 = arith.constant 0 : i32
    %c0_i32_1 = arith.constant 0 : i32
    return %c0_i32, %c0_i32_0 : i32, i32
  }
  func.func @transform_3(%arg0: i32) -> (i32, i32) {
    %c0_i32 = arith.constant 0 : i32
    %c0_i32_0 = arith.constant 0 : i32
    %c0_i32_1 = arith.constant 0 : i32
    return %c0_i32, %c0_i32_0 : i32, i32
  }
  func.func @transform_4(%arg0: i32) -> (i32, i32) {
    %c0_i32 = arith.constant 0 : i32
    %c0_i32_0 = arith.constant 0 : i32
    %c0_i32_1 = arith.constant 0 : i32
    return %c0_i32, %c0_i32_0 : i32, i32
  }
  func.func @transform_5(%arg0: i32) -> (i32, i32) {
    %c0_i32 = arith.constant 0 : i32
    %c0_i32_0 = arith.constant 0 : i32
    %c0_i32_1 = arith.constant 0 : i32
    return %c0_i32, %c0_i32_0 : i32, i32
  }
  func.func @transform_6(%arg0: i32) -> (i32, i32) {
    %c0_i32 = arith.constant 0 : i32
    %c0_i32_0 = arith.constant 0 : i32
    %c0_i32_1 = arith.constant 0 : i32
    return %c0_i32, %c0_i32_0 : i32, i32
  }
  func.func @transform_7(%arg0: i32) -> (i32, i32) {
    %c0_i32 = arith.constant 0 : i32
    %c0_i32_0 = arith.constant 0 : i32
    %c0_i32_1 = arith.constant 0 : i32
    return %c0_i32, %c0_i32_0 : i32, i32
  }
  func.func @transform_8(%arg0: i32) -> (i32, i32) {
    %c0_i32 = arith.constant 0 : i32
    %c0_i32_0 = arith.constant 0 : i32
    %c0_i32_1 = arith.constant 0 : i32
    return %c0_i32, %c0_i32_0 : i32, i32
  }
  func.func @transform_9(%arg0: i32) -> (i32, i32) {
    %c0_i32 = arith.constant 0 : i32
    %c0_i32_0 = arith.constant 0 : i32
    %c0_i32_1 = arith.constant 0 : i32
    return %c0_i32, %c0_i32_0 : i32, i32
  }
  func.func @transform_10(%arg0: i32) -> (i32, i32) {
    %c0_i32 = arith.constant 0 : i32
    %c0_i32_0 = arith.constant 0 : i32
    %c0_i32_1 = arith.constant 0 : i32
    return %c0_i32, %c0_i32_0 : i32, i32
  }
  func.func @transform_11(%arg0: i32) -> (i32, i32, i32, i32) {
    %c0_i32 = arith.constant 0 : i32
    %c0_i32_0 = arith.constant 0 : i32
    %c0_i32_1 = arith.constant 0 : i32
    %c0_i32_2 = arith.constant 0 : i32
    return %arg0, %c0_i32, %c0_i32_0, %c0_i32_1 : i32, i32, i32, i32
  }
}

</mosaic_0001>

<llo_original>
// kernel: sep_conv_block.1
$region0: #{sep_conv_block.1}
  #allocation0 [shape = 'u32[]', space=smem, size = 0x4, offset = 0x4, fixed_abs, tag = 'smem constant byte address 0x4 - core index']
  #allocation1 [shape = 'u32[144,128]{1,0:T(1,128)}', space=vmem, size = 0x12000, scoped, tag = 'internal scratch']
  #allocation2 [shape = 'f32[18,18,128]{2,1,0:T(8,128)}', space=vmem, size = 0x36000, scoped, tag = 'scratch operand']
  #allocation3 [shape = 'f32[1,1]{1,0:T(1,128)S(1)}', space=vmem, size = 0x200, scoped, tag = 'scoped memory for sep_conv_block.1']
  #allocation4 [shape = 'f32[1,1]{1,0:T(1,128)S(1)}', space=vmem, size = 0x200, scoped, tag = 'scoped memory for sep_conv_block.1']
  %s0 = inlined_call_operand.hbm [shape: f32[2,16,16,128], index: 0, kind: input, shape index: {}]
  %s1 = inlined_call_operand.vmem [shape: f32[9,128], index: 1, kind: input, shape index: {}]
  %s2 = inlined_call_operand.vmem [shape: f32[1,128], index: 2, kind: input, shape index: {}]
  %s3 = inlined_call_operand.vmem [shape: f32[1,128], index: 3, kind: input, shape index: {}]
  %s4 = inlined_call_operand.vmem [shape: f32[1,128], index: 4, kind: input, shape index: {}]
  %s5 = inlined_call_operand.<no memory space> [shape: f32[1,1], index: 5, kind: input, shape index: {}]
  %s6 = inlined_call_operand.vmem [shape: bf16[128,256], index: 6, kind: input, shape index: {}]
  %s7 = inlined_call_operand.vmem [shape: f32[1,256], index: 7, kind: input, shape index: {}]
  %s8 = inlined_call_operand.vmem [shape: f32[1,256], index: 8, kind: input, shape index: {}]
  %s9 = inlined_call_operand.vmem [shape: f32[1,256], index: 9, kind: input, shape index: {}]
  %s10 = inlined_call_operand.<no memory space> [shape: f32[1,1], index: 10, kind: input, shape index: {}]
  %s11 = inlined_call_operand.hbm [shape: f32[2,16,16,256], index: 11, kind: output, shape index: {}]
  %s12 = sld [smem:[#allocation0]]
  $region81: #{sep_conv_block.1} parent=0
    _
  %s14 = ssub.s32 1, %s12
  %s15 = scalar_select 0, %s14, %s12
  %v16 = vstv %s5
  %17 = vst [vmem:[#allocation3] sm:$0x1] %v16
  %v18 = vstv %s10
  %19 = vst [vmem:[#allocation4] sm:$0x1] %v18
  $region1: #{sep_conv_block.1} parent=0
    #allocation5 [shape = 'u8[262144]{0}', space=vmem, size = 0x40000, scoped, tag = 'input window, operand 0']
    #allocation6 [shape = 's32[2]{0}', space=sflag, size = 0x8, scoped, tag = 'scoped memory for sep_conv_block.1']
    #allocation7 [shape = 's32[2]{0}', space=sflag, size = 0x8, scoped, tag = 'scoped memory for sep_conv_block.1']
    #allocation8 [shape = 'u8[524288]{0}', space=vmem, size = 0x80000, scoped, tag = 'output window, operand 0']
    %20 = vsyncpa [#allocation6], 0
    %s21 = scalar_lea.sflag [#allocation6], 1
    %22 = vsyncpa %s21, 0
    %23 = vsyncpa [#allocation7], 0
    %s24 = scalar_lea.sflag [#allocation7], 1
    %25 = vsyncpa %s24, 0
    loop: start=0, step=1, limit=4
    $region2: #{sep_conv_block.1} parent=1 // loop_pre_header
      _
    $region3: #{sep_conv_block.1} parent=1 // loop_header
      %s27 = sphi 0, %s31
      %p28 = scmp.ge.s32.totalorder %s27, 4
      %s37 = sphi 0, %s39
      %s40 = sphi 0, %s37
      %s41 = sphi 0, %s40
      %s57 = sphi 0, %s41
      %s61 = sphi 0, %s61
      %s63 = sphi 0, %s61
      %s64 = sphi 0, %s63
      %s78 = sphi 0, %s64
      %s82 = sphi 0, %s82
      %s84 = sphi 0, %s82
      %s85 = sphi 0, %s84
      %s99 = sphi 0, %s85
      %s103 = sphi 0, %s103
      %s105 = sphi 0, %s103
      %s106 = sphi 0, %s105
      %s120 = sphi 0, %s106
      %s124 = sphi 0, %s124
      %s126 = sphi 0, %s124
      %s127 = sphi 0, %s126
      %s141 = sphi 0, %s127
      %s145 = sphi 0, %s145
      %s147 = sphi 0, %s145
      %s148 = sphi 0, %s147
      %s162 = sphi 0, %s148
      %s166 = sphi 0, %s166
      %s168 = sphi 0, %s166
      %s169 = sphi 0, %s168
      %s183 = sphi 0, %s169
      %s187 = sphi 0, %s187
      %s189 = sphi 0, %s187
      %s190 = sphi 0, %s189
      %s204 = sphi 0, %s190
      %s208 = sphi 0, %s208
      %s210 = sphi 0, %s208
      %s211 = sphi 0, %s210
      %s225 = sphi 0, %s211
      %s229 = sphi 0, %s229
      %s231 = sphi 0, %s229
      %s232 = sphi 0, %s231
      %s246 = sphi 0, %s232
      %s250 = sphi 0, %s250
      %s252 = sphi 0, %s250
      %s253 = sphi 0, %s252
      %s267 = sphi 0, %s253
      %s273 = sphi 0, %s275
      %s276 = sphi 0, %s273
      %s277 = sphi 0, %s276
      %s293 = sphi 0, %s277
    $region4: #{sep_conv_block.1} parent=1 // loop_header_branch
      %30 = sbr.rel (%p28) target = $region8
    $region5: #{sep_conv_block.1} parent=1 // loop_body
      %s32 = ssub.s32 %s27, 1
      %s33 = ssub.s32 %s27, 2
      %s34 = sadd.s32 %s27, 1
      %s35 = ssub.s32 %s27, %s34
      %p36 = scmp.eq.s32.totalorder %s35, 0
      %s38 = sadd.s32 %s37, 1
      %s39 = scalar_select %p36, %s37, %s38
      %p42 = pneg %p36
      %p43 = scmp.eq.s32.totalorder %s27, 1
      %p44 = por %p42, %p43
      %p45 = scmp.ne.s32.totalorder %s37, %s40
      %p46 = scmp.eq.s32.totalorder %s27, 0
      %p47 = por %p45, %p46
      %p48 = scmp.ne.s32.totalorder %s37, %s40
      %p49 = scmp.eq.s32.totalorder %s32, 1
      %p50 = por %p48, %p49
      %p51 = scmp.ne.s32.totalorder %s40, %s41
      %p52 = scmp.eq.s32.totalorder %s32, 0
      %p53 = por %p51, %p52
      %p54 = scmp.ne.s32.totalorder %s40, %s41
      %p55 = scmp.eq.s32.totalorder %s33, 1
      %p56 = por %p54, %p55
      %p58 = scmp.ne.s32.totalorder %s41, %s57
      %p59 = scmp.eq.s32.totalorder %s33, 0
      %p60 = por %p58, %p59
      %s62 = sadd.s32 %s61, 1
      %p65 = scmp.eq.s32.totalorder %s27, 1
      %p66 = scmp.ne.s32.totalorder %s61, %s63
      %p67 = scmp.eq.s32.totalorder %s27, 0
      %p68 = por %p66, %p67
      %p69 = scmp.ne.s32.totalorder %s61, %s63
      %p70 = scmp.eq.s32.totalorder %s32, 1
      %p71 = por %p69, %p70
      %p72 = scmp.ne.s32.totalorder %s63, %s64
      %p73 = scmp.eq.s32.totalorder %s32, 0
      %p74 = por %p72, %p73
      %p75 = scmp.ne.s32.totalorder %s63, %s64
      %p76 = scmp.eq.s32.totalorder %s33, 1
      %p77 = por %p75, %p76
      %p79 = scmp.ne.s32.totalorder %s64, %s78
      %p80 = scmp.eq.s32.totalorder %s33, 0
      %p81 = por %p79, %p80
      %s83 = sadd.s32 %s82, 1
      %p86 = scmp.eq.s32.totalorder %s27, 1
      %p87 = scmp.ne.s32.totalorder %s82, %s84
      %p88 = scmp.eq.s32.totalorder %s27, 0
      %p89 = por %p87, %p88
      %p90 = scmp.ne.s32.totalorder %s82, %s84
      %p91 = scmp.eq.s32.totalorder %s32, 1
      %p92 = por %p90, %p91
      %p93 = scmp.ne.s32.totalorder %s84, %s85
      %p94 = scmp.eq.s32.totalorder %s32, 0
      %p95 = por %p93, %p94
      %p96 = scmp.ne.s32.totalorder %s84, %s85
      %p97 = scmp.eq.s32.totalorder %s33, 1
      %p98 = por %p96, %p97
      %p100 = scmp.ne.s32.totalorder %s85, %s99
      %p101 = scmp.eq.s32.totalorder %s33, 0
      %p102 = por %p100, %p101
      %s104 = sadd.s32 %s103, 1
      %p107 = scmp.eq.s32.totalorder %s27, 1
      %p108 = scmp.ne.s32.totalorder %s103, %s105
      %p109 = scmp.eq.s32.totalorder %s27, 0
      %p110 = por %p108, %p109
      %p111 = scmp.ne.s32.totalorder %s103, %s105
      %p112 = scmp.eq.s32.totalorder %s32, 1
      %p113 = por %p111, %p112
      %p114 = scmp.ne.s32.totalorder %s105, %s106
      %p115 = scmp.eq.s32.totalorder %s32, 0
      %p116 = por %p114, %p115
      %p117 = scmp.ne.s32.totalorder %s105, %s106
      %p118 = scmp.eq.s32.totalorder %s33, 1
      %p119 = por %p117, %p118
      %p121 = scmp.ne.s32.totalorder %s106, %s120
      %p122 = scmp.eq.s32.totalorder %s33, 0
      %p123 = por %p121, %p122
      %s125 = sadd.s32 %s124, 1
      %p128 = scmp.eq.s32.totalorder %s27, 1
      %p129 = scmp.ne.s32.totalorder %s124, %s126
      %p130 = scmp.eq.s32.totalorder %s27, 0
      %p131 = por %p129, %p130
      %p132 = scmp.ne.s32.totalorder %s124, %s126
      %p133 = scmp.eq.s32.totalorder %s32, 1
      %p134 = por %p132, %p133
      %p135 = scmp.ne.s32.totalorder %s126, %s127
      %p136 = scmp.eq.s32.totalorder %s32, 0
      %p137 = por %p135, %p136
      %p138 = scmp.ne.s32.totalorder %s126, %s127
      %p139 = scmp.eq.s32.totalorder %s33, 1
      %p140 = por %p138, %p139
      %p142 = scmp.ne.s32.totalorder %s127, %s141
      %p143 = scmp.eq.s32.totalorder %s33, 0
      %p144 = por %p142, %p143
      %s146 = sadd.s32 %s145, 1
      %p149 = scmp.eq.s32.totalorder %s27, 1
      %p150 = scmp.ne.s32.totalorder %s145, %s147
      %p151 = scmp.eq.s32.totalorder %s27, 0
      %p152 = por %p150, %p151
      %p153 = scmp.ne.s32.totalorder %s145, %s147
      %p154 = scmp.eq.s32.totalorder %s32, 1
      %p155 = por %p153, %p154
      %p156 = scmp.ne.s32.totalorder %s147, %s148
      %p157 = scmp.eq.s32.totalorder %s32, 0
      %p158 = por %p156, %p157
      %p159 = scmp.ne.s32.totalorder %s147, %s148
      %p160 = scmp.eq.s32.totalorder %s33, 1
      %p161 = por %p159, %p160
      %p163 = scmp.ne.s32.totalorder %s148, %s162
      %p164 = scmp.eq.s32.totalorder %s33, 0
      %p165 = por %p163, %p164
      %s167 = sadd.s32 %s166, 1
      %p170 = scmp.eq.s32.totalorder %s27, 1
      %p171 = scmp.ne.s32.totalorder %s166, %s168
      %p172 = scmp.eq.s32.totalorder %s27, 0
      %p173 = por %p171, %p172
      %p174 = scmp.ne.s32.totalorder %s166, %s168
      %p175 = scmp.eq.s32.totalorder %s32, 1
      %p176 = por %p174, %p175
      %p177 = scmp.ne.s32.totalorder %s168, %s169
      %p178 = scmp.eq.s32.totalorder %s32, 0
      %p179 = por %p177, %p178
      %p180 = scmp.ne.s32.totalorder %s168, %s169
      %p181 = scmp.eq.s32.totalorder %s33, 1
      %p182 = por %p180, %p181
      %p184 = scmp.ne.s32.totalorder %s169, %s183
      %p185 = scmp.eq.s32.totalorder %s33, 0
      %p186 = por %p184, %p185
      %s188 = sadd.s32 %s187, 1
      %p191 = scmp.eq.s32.totalorder %s27, 1
      %p192 = scmp.ne.s32.totalorder %s187, %s189
      %p193 = scmp.eq.s32.totalorder %s27, 0
      %p194 = por %p192, %p193
      %p195 = scmp.ne.s32.totalorder %s187, %s189
      %p196 = scmp.eq.s32.totalorder %s32, 1
      %p197 = por %p195, %p196
      %p198 = scmp.ne.s32.totalorder %s189, %s190
      %p199 = scmp.eq.s32.totalorder %s32, 0
      %p200 = por %p198, %p199
      %p201 = scmp.ne.s32.totalorder %s189, %s190
      %p202 = scmp.eq.s32.totalorder %s33, 1
      %p203 = por %p201, %p202
      %p205 = scmp.ne.s32.totalorder %s190, %s204
      %p206 = scmp.eq.s32.totalorder %s33, 0
      %p207 = por %p205, %p206
      %s209 = sadd.s32 %s208, 1
      %p212 = scmp.eq.s32.totalorder %s27, 1
      %p213 = scmp.ne.s32.totalorder %s208, %s210
      %p214 = scmp.eq.s32.totalorder %s27, 0
      %p215 = por %p213, %p214
      %p216 = scmp.ne.s32.totalorder %s208, %s210
      %p217 = scmp.eq.s32.totalorder %s32, 1
      %p218 = por %p216, %p217
      %p219 = scmp.ne.s32.totalorder %s210, %s211
      %p220 = scmp.eq.s32.totalorder %s32, 0
      %p221 = por %p219, %p220
      %p222 = scmp.ne.s32.totalorder %s210, %s211
      %p223 = scmp.eq.s32.totalorder %s33, 1
      %p224 = por %p222, %p223
      %p226 = scmp.ne.s32.totalorder %s211, %s225
      %p227 = scmp.eq.s32.totalorder %s33, 0
      %p228 = por %p226, %p227
      %s230 = sadd.s32 %s229, 1
      %p233 = scmp.eq.s32.totalorder %s27, 1
      %p234 = scmp.ne.s32.totalorder %s229, %s231
      %p235 = scmp.eq.s32.totalorder %s27, 0
      %p236 = por %p234, %p235
      %p237 = scmp.ne.s32.totalorder %s229, %s231
      %p238 = scmp.eq.s32.totalorder %s32, 1
      %p239 = por %p237, %p238
      %p240 = scmp.ne.s32.totalorder %s231, %s232
      %p241 = scmp.eq.s32.totalorder %s32, 0
      %p242 = por %p240, %p241
      %p243 = scmp.ne.s32.totalorder %s231, %s232
      %p244 = scmp.eq.s32.totalorder %s33, 1
      %p245 = por %p243, %p244
      %p247 = scmp.ne.s32.totalorder %s232, %s246
      %p248 = scmp.eq.s32.totalorder %s33, 0
      %p249 = por %p247, %p248
      %s251 = sadd.s32 %s250, 1
      %p254 = scmp.eq.s32.totalorder %s27, 1
      %p255 = scmp.ne.s32.totalorder %s250, %s252
      %p256 = scmp.eq.s32.totalorder %s27, 0
      %p257 = por %p255, %p256
      %p258 = scmp.ne.s32.totalorder %s250, %s252
      %p259 = scmp.eq.s32.totalorder %s32, 1
      %p260 = por %p258, %p259
      %p261 = scmp.ne.s32.totalorder %s252, %s253
      %p262 = scmp.eq.s32.totalorder %s32, 0
      %p263 = por %p261, %p262
      %p264 = scmp.ne.s32.totalorder %s252, %s253
      %p265 = scmp.eq.s32.totalorder %s33, 1
      %p266 = por %p264, %p265
      %p268 = scmp.ne.s32.totalorder %s253, %s267
      %p269 = scmp.eq.s32.totalorder %s33, 0
      %p270 = por %p268, %p269
      %s271 = ssub.s32 %s27, %s34
      %p272 = scmp.eq.s32.totalorder %s271, 0
      %s274 = sadd.s32 %s273, 1
      %s275 = scalar_select %p272, %s273, %s274
      %p278 = pneg %p272
      %p279 = scmp.eq.s32.totalorder %s27, 1
      %p280 = por %p278, %p279
      %p281 = scmp.ne.s32.totalorder %s273, %s276
      %p282 = scmp.eq.s32.totalorder %s27, 0
      %p283 = por %p281, %p282
      %p284 = scmp.ne.s32.totalorder %s273, %s276
      %p285 = scmp.eq.s32.totalorder %s32, 1
      %p286 = por %p284, %p285
      %p287 = scmp.ne.s32.totalorder %s276, %s277
      %p288 = scmp.eq.s32.totalorder %s32, 0
      %p289 = por %p287, %p288
      %p290 = scmp.ne.s32.totalorder %s276, %s277
      %p291 = scmp.eq.s32.totalorder %s33, 1
      %p292 = por %p290, %p291
      %p294 = scmp.ne.s32.totalorder %s277, %s293
      %p295 = scmp.eq.s32.totalorder %s33, 0
      %p296 = por %p294, %p295
      %p297 = scmp.le.s32.totalorder 1, %s27
      %p298 = scmp.lt.s32.totalorder %s27, 3
      %p299 = pnand %p297, %p298
      %p300 = pneg %p299
      // Predicated region
      $region9: #{sep_conv_block.1} parent=5 // pred_check
        _
      $region10: #{sep_conv_block.1} parent=5 // pred_check_branch
        %302 = sbr.rel (%p299) target = $region12
      $region11: #{sep_conv_block.1} parent=5 // pred_region
        %s303 = ssub.s32 %s27, 1
        // Predicated region
        $region13: #{sep_conv_block.1} parent=11 // pred_check
          %p304 = pneg %p74
        $region14: #{sep_conv_block.1} parent=11 // pred_check_branch
          %306 = sbr.rel (%p304) target = $region16
        $region15: #{sep_conv_block.1} parent=11 // pred_region
          _
        $region16: #{sep_conv_block.1} parent=11 // pred_fallthru
          _
        // Predicated region
        $region17: #{sep_conv_block.1} parent=11 // pred_check
          %p307 = pneg %p95
        $region18: #{sep_conv_block.1} parent=11 // pred_check_branch
          %309 = sbr.rel (%p307) target = $region20
        $region19: #{sep_conv_block.1} parent=11 // pred_region
          _
        $region20: #{sep_conv_block.1} parent=11 // pred_fallthru
          _
        // Predicated region
        $region21: #{sep_conv_block.1} parent=11 // pred_check
          %p310 = pneg %p116
        $region22: #{sep_conv_block.1} parent=11 // pred_check_branch
          %312 = sbr.rel (%p310) target = $region24
        $region23: #{sep_conv_block.1} parent=11 // pred_region
          _
        $region24: #{sep_conv_block.1} parent=11 // pred_fallthru
          _
        // Predicated region
        $region25: #{sep_conv_block.1} parent=11 // pred_check
          %p313 = pneg %p137
        $region26: #{sep_conv_block.1} parent=11 // pred_check_branch
          %315 = sbr.rel (%p313) target = $region28
        $region27: #{sep_conv_block.1} parent=11 // pred_region
          _
        $region28: #{sep_conv_block.1} parent=11 // pred_fallthru
          _
        // Predicated region
        $region29: #{sep_conv_block.1} parent=11 // pred_check
          %p316 = pneg %p158
        $region30: #{sep_conv_block.1} parent=11 // pred_check_branch
          %318 = sbr.rel (%p316) target = $region32
        $region31: #{sep_conv_block.1} parent=11 // pred_region
          _
        $region32: #{sep_conv_block.1} parent=11 // pred_fallthru
          _
        // Predicated region
        $region33: #{sep_conv_block.1} parent=11 // pred_check
          %p319 = pneg %p179
        $region34: #{sep_conv_block.1} parent=11 // pred_check_branch
          %321 = sbr.rel (%p319) target = $region36
        $region35: #{sep_conv_block.1} parent=11 // pred_region
          _
        $region36: #{sep_conv_block.1} parent=11 // pred_fallthru
          _
        // Predicated region
        $region37: #{sep_conv_block.1} parent=11 // pred_check
          %p322 = pneg %p200
        $region38: #{sep_conv_block.1} parent=11 // pred_check_branch
          %324 = sbr.rel (%p322) target = $region40
        $region39: #{sep_conv_block.1} parent=11 // pred_region
          _
        $region40: #{sep_conv_block.1} parent=11 // pred_fallthru
          _
        // Predicated region
        $region41: #{sep_conv_block.1} parent=11 // pred_check
          %p325 = pneg %p221
        $region42: #{sep_conv_block.1} parent=11 // pred_check_branch
          %327 = sbr.rel (%p325) target = $region44
        $region43: #{sep_conv_block.1} parent=11 // pred_region
          _
        $region44: #{sep_conv_block.1} parent=11 // pred_fallthru
          _
        // Predicated region
        $region45: #{sep_conv_block.1} parent=11 // pred_check
          %p328 = pneg %p242
        $region46: #{sep_conv_block.1} parent=11 // pred_check_branch
          %330 = sbr.rel (%p328) target = $region48
        $region47: #{sep_conv_block.1} parent=11 // pred_region
          _
        $region48: #{sep_conv_block.1} parent=11 // pred_fallthru
          _
        // Predicated region
        $region49: #{sep_conv_block.1} parent=11 // pred_check
          %p331 = pneg %p263
        $region50: #{sep_conv_block.1} parent=11 // pred_check_branch
          %333 = sbr.rel (%p331) target = $region52
        $region51: #{sep_conv_block.1} parent=11 // pred_region
          _
        $region52: #{sep_conv_block.1} parent=11 // pred_fallthru
          _
      $region12: #{sep_conv_block.1} parent=5 // pred_fallthru
        _
      %p334 = scmp.lt.s32.totalorder %s27, 2
      // Predicated region
      $region53: #{sep_conv_block.1} parent=5 // pred_check
        %p335 = pneg %p334
      $region54: #{sep_conv_block.1} parent=5 // pred_check_branch
        %337 = sbr.rel (%p335) target = $region56
      $region55: #{sep_conv_block.1} parent=5 // pred_region
        // Predicated region
        $region57: #{sep_conv_block.1} parent=55 // pred_check
          %p338 = pneg %p47
        $region58: #{sep_conv_block.1} parent=55 // pred_check_branch
          %340 = sbr.rel (%p338) target = $region60
        $region59: #{sep_conv_block.1} parent=55 // pred_region
          %s341 = sand.u32 %s37, 1
          %s342 = scalar_lea.sflag [#allocation6], %s341
          %s343 = sand.u32 %s37, 1
          %s344 = smul.addr %s343, 256
          %s345 = scalar_lea.vmem [#allocation5], %s344
          %s347 = ssub.s32 4096, 4096
          %348 = vsyncadd %s342, %s347
          %s349 = smul.addr %s27, 32
          %s350 = smul.addr %s349, 128
          %s351 = scalar_lea.hbm %s0, %s350
          %s352 = sshll.u32 %s345, 4
          %s353 = int_to_ptr.vmem [resolvable:$true] %s352
          %358 = dma.hbm_to_vmem [thread:$0]  %s351, 4096, %s353, %s342, 128, 128, 8
        $region60: #{sep_conv_block.1} parent=55 // pred_fallthru
          _
      $region56: #{sep_conv_block.1} parent=5 // pred_fallthru
        _
      %p359 = scmp.le.s32.totalorder 1, %s27
      %p360 = scmp.lt.s32.totalorder %s27, 3
      %p361 = pnand %p359, %p360
      %p362 = pneg %p361
      // Predicated region
      $region61: #{sep_conv_block.1} parent=5 // pred_check
        _
      $region62: #{sep_conv_block.1} parent=5 // pred_check_branch
        %364 = sbr.rel (%p361) target = $region64
      $region63: #{sep_conv_block.1} parent=5 // pred_region
        %s365 = ssub.s32 %s27, 1
        %s366 = sand.u32 %s40, 1
        %s367 = scalar_lea.sflag [#allocation6], %s366
        %s368 = sand.u32 %s40, 1
        %s369 = smul.addr %s368, 256
        %s370 = scalar_lea.vmem [#allocation5], %s369
        // Predicated region
        $region65: #{sep_conv_block.1} parent=63 // pred_check
          %p371 = pneg %p53
        $region66: #{sep_conv_block.1} parent=63 // pred_check_branch
          %373 = sbr.rel (%p371) target = $region68
        $region67: #{sep_conv_block.1} parent=63 // pred_region
          %374 = dma.done %s367, 4096
        $region68: #{sep_conv_block.1} parent=63 // pred_fallthru
          _
        %s375 = sand.u32 %s40, 1
        %s376 = scalar_lea.sflag [#allocation6], %s375
        %s377 = sand.u32 %s40, 1
        %s378 = smul.addr %s377, 256
        %s379 = scalar_lea.vmem [#allocation5], %s378
        %p380 = pneg %p53
        %p381 = pneg %p50
        %p382 = pneg %p74
        %p383 = pneg %p71
        %p384 = pneg %p95
        %p385 = pneg %p92
        %p386 = pneg %p116
        %p387 = pneg %p113
        %p388 = pneg %p137
        %p389 = pneg %p134
        %p390 = pneg %p158
        %p391 = pneg %p155
        %p392 = pneg %p179
        %p393 = pneg %p176
        %p394 = pneg %p200
        %p395 = pneg %p197
        %p396 = pneg %p221
        %p397 = pneg %p218
        %p398 = pneg %p242
        %p399 = pneg %p239
        %p400 = pneg %p263
        %p401 = pneg %p260
        %p402 = pneg %p289
        %p403 = pneg %p286
        %s404 = sand.u32 %s276, 1
        %s405 = scalar_lea.sflag [#allocation7], %s404
        %s406 = sand.u32 %s276, 1
        %s407 = smul.addr %s406, 512
        %s408 = scalar_lea.vmem [#allocation8], %s407
        %v410 = vld [vmem:[%s370] sm:$0xff]
        %v411 = vld [vmem:[%s370 + $0x8] sm:$0xff]
        %v412 = vld [vmem:[%s370 + $0x10] sm:$0xff]
        %v413 = vld [vmem:[%s370 + $0x18] sm:$0xff]
        %v414 = vld [vmem:[%s370 + $0x20] sm:$0xff]
        %v415 = vld [vmem:[%s370 + $0x28] sm:$0xff]
        %v416 = vld [vmem:[%s370 + $0x30] sm:$0xff]
        %v417 = vld [vmem:[%s370 + $0x38] sm:$0xff]
        %v418 = vld [vmem:[%s370 + $0x40] sm:$0xff]
        %v419 = vld [vmem:[%s370 + $0x48] sm:$0xff]
        %v420 = vld [vmem:[%s370 + $0x50] sm:$0xff]
        %v421 = vld [vmem:[%s370 + $0x58] sm:$0xff]
        %v422 = vld [vmem:[%s370 + $0x60] sm:$0xff]
        %v423 = vld [vmem:[%s370 + $0x68] sm:$0xff]
        %v424 = vld [vmem:[%s370 + $0x70] sm:$0xff]
        %v425 = vld [vmem:[%s370 + $0x78] sm:$0xff]
        %v426 = vld [vmem:[%s370 + $0x80] sm:$0xff]
        %v427 = vld [vmem:[%s370 + $0x88] sm:$0xff]
        %v428 = vld [vmem:[%s370 + $0x90] sm:$0xff]
        %v429 = vld [vmem:[%s370 + $0x98] sm:$0xff]
        %v430 = vld [vmem:[%s370 + $0xa0] sm:$0xff]
        %v431 = vld [vmem:[%s370 + $0xa8] sm:$0xff]
        %v432 = vld [vmem:[%s370 + $0xb0] sm:$0xff]
        %v433 = vld [vmem:[%s370 + $0xb8] sm:$0xff]
        %v434 = vld [vmem:[%s370 + $0xc0] sm:$0xff]
        %v435 = vld [vmem:[%s370 + $0xc8] sm:$0xff]
        %v436 = vld [vmem:[%s370 + $0xd0] sm:$0xff]
        %v437 = vld [vmem:[%s370 + $0xd8] sm:$0xff]
        %v438 = vld [vmem:[%s370 + $0xe0] sm:$0xff]
        %v439 = vld [vmem:[%s370 + $0xe8] sm:$0xff]
        %v440 = vld [vmem:[%s370 + $0xf0] sm:$0xff]
        %v441 = vld [vmem:[%s370 + $0xf8] sm:$0xff]
        %v442 = vmax.f32 %v410, 0.0
        %v443 = vmax.f32 %v411, 0.0
        %v444 = vmax.f32 %v412, 0.0
        %v445 = vmax.f32 %v413, 0.0
        %v446 = vmax.f32 %v414, 0.0
        %v447 = vmax.f32 %v415, 0.0
        %v448 = vmax.f32 %v416, 0.0
        %v449 = vmax.f32 %v417, 0.0
        %v450 = vmax.f32 %v418, 0.0
        %v451 = vmax.f32 %v419, 0.0
        %v452 = vmax.f32 %v420, 0.0
        %v453 = vmax.f32 %v421, 0.0
        %v454 = vmax.f32 %v422, 0.0
        %v455 = vmax.f32 %v423, 0.0
        %v456 = vmax.f32 %v424, 0.0
        %v457 = vmax.f32 %v425, 0.0
        %v458 = vmax.f32 %v426, 0.0
        %v459 = vmax.f32 %v427, 0.0
        %v460 = vmax.f32 %v428, 0.0
        %v461 = vmax.f32 %v429, 0.0
        %v462 = vmax.f32 %v430, 0.0
        %v463 = vmax.f32 %v431, 0.0
        %v464 = vmax.f32 %v432, 0.0
        %v465 = vmax.f32 %v433, 0.0
        %v466 = vmax.f32 %v434, 0.0
        %v467 = vmax.f32 %v435, 0.0
        %v468 = vmax.f32 %v436, 0.0
        %v469 = vmax.f32 %v437, 0.0
        %v470 = vmax.f32 %v438, 0.0
        %v471 = vmax.f32 %v439, 0.0
        %v472 = vmax.f32 %v440, 0.0
        %v473 = vmax.f32 %v441, 0.0
        %474 = vst [vmem:[#allocation2] sm:$0xff] 0.0
        %475 = vst [vmem:[#allocation2 + $0x8] sm:$0xff] 0.0
        %476 = vst [vmem:[#allocation2 + $0x10] sm:$0x3] 0.0
        %477 = vst [vmem:[#allocation2 + $0x18] sm:$0xff] 0.0
        %478 = vst [vmem:[#allocation2 + $0x20] sm:$0xff] 0.0
        %479 = vst [vmem:[#allocation2 + $0x28] sm:$0x3] 0.0
        %480 = vst [vmem:[#allocation2 + $0x30] sm:$0xff] 0.0
        %481 = vst [vmem:[#allocation2 + $0x38] sm:$0xff] 0.0
        %482 = vst [vmem:[#allocation2 + $0x40] sm:$0x3] 0.0
        %483 = vst [vmem:[#allocation2 + $0x48] sm:$0xff] 0.0
        %484 = vst [vmem:[#allocation2 + $0x50] sm:$0xff] 0.0
        %485 = vst [vmem:[#allocation2 + $0x58] sm:$0x3] 0.0
        %486 = vst [vmem:[#allocation2 + $0x60] sm:$0xff] 0.0
        %487 = vst [vmem:[#allocation2 + $0x68] sm:$0xff] 0.0
        %488 = vst [vmem:[#allocation2 + $0x70] sm:$0x3] 0.0
        %489 = vst [vmem:[#allocation2 + $0x78] sm:$0xff] 0.0
        %490 = vst [vmem:[#allocation2 + $0x80] sm:$0xff] 0.0
        %491 = vst [vmem:[#allocation2 + $0x88] sm:$0x3] 0.0
        %492 = vst [vmem:[#allocation2 + $0x90] sm:$0xff] 0.0
        %493 = vst [vmem:[#allocation2 + $0x98] sm:$0xff] 0.0
        %494 = vst [vmem:[#allocation2 + $0xa0] sm:$0x3] 0.0
        %495 = vst [vmem:[#allocation2 + $0xa8] sm:$0xff] 0.0
        %496 = vst [vmem:[#allocation2 + $0xb0] sm:$0xff] 0.0
        %497 = vst [vmem:[#allocation2 + $0xb8] sm:$0x3] 0.0
        %498 = vst [vmem:[#allocation2 + $0xc0] sm:$0xff] 0.0
        %499 = vst [vmem:[#allocation2 + $0xc8] sm:$0xff] 0.0
        %500 = vst [vmem:[#allocation2 + $0xd0] sm:$0x3] 0.0
        %501 = vst [vmem:[#allocation2 + $0xd8] sm:$0xff] 0.0
        %502 = vst [vmem:[#allocation2 + $0xe0] sm:$0xff] 0.0
        %503 = vst [vmem:[#allocation2 + $0xe8] sm:$0x3] 0.0
        %504 = vst [vmem:[#allocation2 + $0xf0] sm:$0xff] 0.0
        %505 = vst [vmem:[#allocation2 + $0xf8] sm:$0xff] 0.0
        %506 = vst [vmem:[#allocation2 + $0x100] sm:$0x3] 0.0
        %507 = vst [vmem:[#allocation2 + $0x108] sm:$0xff] 0.0
        %508 = vst [vmem:[#allocation2 + $0x110] sm:$0xff] 0.0
        %509 = vst [vmem:[#allocation2 + $0x118] sm:$0x3] 0.0
        %510 = vst [vmem:[#allocation2 + $0x120] sm:$0xff] 0.0
        %511 = vst [vmem:[#allocation2 + $0x128] sm:$0xff] 0.0
        %512 = vst [vmem:[#allocation2 + $0x130] sm:$0x3] 0.0
        %513 = vst [vmem:[#allocation2 + $0x138] sm:$0xff] 0.0
        %514 = vst [vmem:[#allocation2 + $0x140] sm:$0xff] 0.0
        %515 = vst [vmem:[#allocation2 + $0x148] sm:$0x3] 0.0
        %516 = vst [vmem:[#allocation2 + $0x150] sm:$0xff] 0.0
        %517 = vst [vmem:[#allocation2 + $0x158] sm:$0xff] 0.0
        %518 = vst [vmem:[#allocation2 + $0x160] sm:$0x3] 0.0
        %519 = vst [vmem:[#allocation2 + $0x168] sm:$0xff] 0.0
        %520 = vst [vmem:[#allocation2 + $0x170] sm:$0xff] 0.0
        %521 = vst [vmem:[#allocation2 + $0x178] sm:$0x3] 0.0
        %522 = vst [vmem:[#allocation2 + $0x180] sm:$0xff] 0.0
        %523 = vst [vmem:[#allocation2 + $0x188] sm:$0xff] 0.0
        %524 = vst [vmem:[#allocation2 + $0x190] sm:$0x3] 0.0
        %525 = vst [vmem:[#allocation2 + $0x198] sm:$0xff] 0.0
        %526 = vst [vmem:[#allocation2 + $0x1a0] sm:$0xff] 0.0
        %527 = vst [vmem:[#allocation2 + $0x1a8] sm:$0x3] 0.0
        %s528 = scalar_lea.vmem [#allocation2], 24
        %529 = vst [vmem:[%s528 + $0x1] sm:$0xff] %v442
        %530 = vst [vmem:[%s528 + $0x9] sm:$0xff] %v443
        %531 = vst [vmem:[%s528 + $0x19] sm:$0xff] %v444
        %532 = vst [vmem:[%s528 + $0x21] sm:$0xff] %v445
        %533 = vst [vmem:[%s528 + $0x31] sm:$0xff] %v446
        %534 = vst [vmem:[%s528 + $0x39] sm:$0xff] %v447
        %535 = vst [vmem:[%s528 + $0x49] sm:$0xff] %v448
        %536 = vst [vmem:[%s528 + $0x51] sm:$0xff] %v449
        %537 = vst [vmem:[%s528 + $0x61] sm:$0xff] %v450
        %538 = vst [vmem:[%s528 + $0x69] sm:$0xff] %v451
        %539 = vst [vmem:[%s528 + $0x79] sm:$0xff] %v452
        %540 = vst [vmem:[%s528 + $0x81] sm:$0xff] %v453
        %541 = vst [vmem:[%s528 + $0x91] sm:$0xff] %v454
        %542 = vst [vmem:[%s528 + $0x99] sm:$0xff] %v455
        %543 = vst [vmem:[%s528 + $0xa9] sm:$0xff] %v456
        %544 = vst [vmem:[%s528 + $0xb1] sm:$0xff] %v457
        %545 = vst [vmem:[%s528 + $0xc1] sm:$0xff] %v458
        %546 = vst [vmem:[%s528 + $0xc9] sm:$0xff] %v459
        %547 = vst [vmem:[%s528 + $0xd9] sm:$0xff] %v460
        %548 = vst [vmem:[%s528 + $0xe1] sm:$0xff] %v461
        %549 = vst [vmem:[%s528 + $0xf1] sm:$0xff] %v462
        %550 = vst [vmem:[%s528 + $0xf9] sm:$0xff] %v463
        %551 = vst [vmem:[%s528 + $0x109] sm:$0xff] %v464
        %552 = vst [vmem:[%s528 + $0x111] sm:$0xff] %v465
        %553 = vst [vmem:[%s528 + $0x121] sm:$0xff] %v466
        %554 = vst [vmem:[%s528 + $0x129] sm:$0xff] %v467
        %555 = vst [vmem:[%s528 + $0x139] sm:$0xff] %v468
        %556 = vst [vmem:[%s528 + $0x141] sm:$0xff] %v469
        %557 = vst [vmem:[%s528 + $0x151] sm:$0xff] %v470
        %558 = vst [vmem:[%s528 + $0x159] sm:$0xff] %v471
        %559 = vst [vmem:[%s528 + $0x169] sm:$0xff] %v472
        %560 = vst [vmem:[%s528 + $0x171] sm:$0xff] %v473
        %v561 = vld [vmem:[%s1] sm:$0xff]
        %v562 = vld [vmem:[%s1 + $0x8] sm:$0x1]
        %v563 = vld [vmem:[#allocation2] sm:$0xff]
        %v564 = vld [vmem:[#allocation2 + $0x8] sm:$0xff]
        %v565 = vld [vmem:[#allocation2 + $0x18] sm:$0xff]
        %v566 = vld [vmem:[#allocation2 + $0x20] sm:$0xff]
        %v567 = vld [vmem:[#allocation2 + $0x30] sm:$0xff]
        %v568 = vld [vmem:[#allocation2 + $0x38] sm:$0xff]
        %v569 = vld [vmem:[#allocation2 + $0x48] sm:$0xff]
        %v570 = vld [vmem:[#allocation2 + $0x50] sm:$0xff]
        %v571 = vld [vmem:[#allocation2 + $0x60] sm:$0xff]
        %v572 = vld [vmem:[#allocation2 + $0x68] sm:$0xff]
        %v573 = vld [vmem:[#allocation2 + $0x78] sm:$0xff]
        %v574 = vld [vmem:[#allocation2 + $0x80] sm:$0xff]
        %v575 = vld [vmem:[#allocation2 + $0x90] sm:$0xff]
        %v576 = vld [vmem:[#allocation2 + $0x98] sm:$0xff]
        %v577 = vld [vmem:[#allocation2 + $0xa8] sm:$0xff]
        %v578 = vld [vmem:[#allocation2 + $0xb0] sm:$0xff]
        %v579 = vld [vmem:[#allocation2 + $0xc0] sm:$0xff]
        %v580 = vld [vmem:[#allocation2 + $0xc8] sm:$0xff]
        %v581 = vld [vmem:[#allocation2 + $0xd8] sm:$0xff]
        %v582 = vld [vmem:[#allocation2 + $0xe0] sm:$0xff]
        %v583 = vld [vmem:[#allocation2 + $0xf0] sm:$0xff]
        %v584 = vld [vmem:[#allocation2 + $0xf8] sm:$0xff]
        %v585 = vld [vmem:[#allocation2 + $0x108] sm:$0xff]
        %v586 = vld [vmem:[#allocation2 + $0x110] sm:$0xff]
        %v587 = vld [vmem:[#allocation2 + $0x120] sm:$0xff]
        %v588 = vld [vmem:[#allocation2 + $0x128] sm:$0xff]
        %v589 = vld [vmem:[#allocation2 + $0x138] sm:$0xff]
        %v590 = vld [vmem:[#allocation2 + $0x140] sm:$0xff]
        %v591 = vld [vmem:[#allocation2 + $0x150] sm:$0xff]
        %v592 = vld [vmem:[#allocation2 + $0x158] sm:$0xff]
        %v593 = vld [vmem:[#allocation2 + $0x168] sm:$0xff]
        %v594 = vld [vmem:[#allocation2 + $0x170] sm:$0xff]
        %v595 = vlaneseq
        %v596 = vshrl.u32 %v595, 7
        %v597 = vsub.s32 0, %v596
        %v598 = vrot.slane %v561, %v597
        %v599 = vmul.f32 %v563, %v598
        %v600 = vmul.f32 %v564, %v598
        %v601 = vmul.f32 %v565, %v598
        %v602 = vmul.f32 %v566, %v598
        %v603 = vmul.f32 %v567, %v598
        %v604 = vmul.f32 %v568, %v598
        %v605 = vmul.f32 %v569, %v598
        %v606 = vmul.f32 %v570, %v598
        %v607 = vmul.f32 %v571, %v598
        %v608 = vmul.f32 %v572, %v598
        %v609 = vmul.f32 %v573, %v598
        %v610 = vmul.f32 %v574, %v598
        %v611 = vmul.f32 %v575, %v598
        %v612 = vmul.f32 %v576, %v598
        %v613 = vmul.f32 %v577, %v598
        %v614 = vmul.f32 %v578, %v598
        %v615 = vmul.f32 %v579, %v598
        %v616 = vmul.f32 %v580, %v598
        %v617 = vmul.f32 %v581, %v598
        %v618 = vmul.f32 %v582, %v598
        %v619 = vmul.f32 %v583, %v598
        %v620 = vmul.f32 %v584, %v598
        %v621 = vmul.f32 %v585, %v598
        %v622 = vmul.f32 %v586, %v598
        %v623 = vmul.f32 %v587, %v598
        %v624 = vmul.f32 %v588, %v598
        %v625 = vmul.f32 %v589, %v598
        %v626 = vmul.f32 %v590, %v598
        %v627 = vmul.f32 %v591, %v598
        %v628 = vmul.f32 %v592, %v598
        %v629 = vmul.f32 %v593, %v598
        %v630 = vmul.f32 %v594, %v598
        %v631 = vadd.f32 %v599, 0.0
        %v632 = vadd.f32 %v600, 0.0
        %v633 = vadd.f32 %v601, 0.0
        %v634 = vadd.f32 %v602, 0.0
        %v635 = vadd.f32 %v603, 0.0
        %v636 = vadd.f32 %v604, 0.0
        %v637 = vadd.f32 %v605, 0.0
        %v638 = vadd.f32 %v606, 0.0
        %v639 = vadd.f32 %v607, 0.0
        %v640 = vadd.f32 %v608, 0.0
        %v641 = vadd.f32 %v609, 0.0
        %v642 = vadd.f32 %v610, 0.0
        %v643 = vadd.f32 %v611, 0.0
        %v644 = vadd.f32 %v612, 0.0
        %v645 = vadd.f32 %v613, 0.0
        %v646 = vadd.f32 %v614, 0.0
        %v647 = vadd.f32 %v615, 0.0
        %v648 = vadd.f32 %v616, 0.0
        %v649 = vadd.f32 %v617, 0.0
        %v650 = vadd.f32 %v618, 0.0
        %v651 = vadd.f32 %v619, 0.0
        %v652 = vadd.f32 %v620, 0.0
        %v653 = vadd.f32 %v621, 0.0
        %v654 = vadd.f32 %v622, 0.0
        %v655 = vadd.f32 %v623, 0.0
        %v656 = vadd.f32 %v624, 0.0
        %v657 = vadd.f32 %v625, 0.0
        %v658 = vadd.f32 %v626, 0.0
        %v659 = vadd.f32 %v627, 0.0
        %v660 = vadd.f32 %v628, 0.0
        %v661 = vadd.f32 %v629, 0.0
        %v662 = vadd.f32 %v630, 0.0
        %v663 = vld [vmem:[#allocation2 + $0x1] sm:$0xff]
        %v664 = vld [vmem:[#allocation2 + $0x9] sm:$0xff]
        %v665 = vld [vmem:[#allocation2 + $0x19] sm:$0xff]
        %v666 = vld [vmem:[#allocation2 + $0x21] sm:$0xff]
        %v667 = vld [vmem:[#allocation2 + $0x31] sm:$0xff]
        %v668 = vld [vmem:[#allocation2 + $0x39] sm:$0xff]
        %v669 = vld [vmem:[#allocation2 + $0x49] sm:$0xff]
        %v670 = vld [vmem:[#allocation2 + $0x51] sm:$0xff]
        %v671 = vld [vmem:[#allocation2 + $0x61] sm:$0xff]
        %v672 = vld [vmem:[#allocation2 + $0x69] sm:$0xff]
        %v673 = vld [vmem:[#allocation2 + $0x79] sm:$0xff]
        %v674 = vld [vmem:[#allocation2 + $0x81] sm:$0xff]
        %v675 = vld [vmem:[#allocation2 + $0x91] sm:$0xff]
        %v676 = vld [vmem:[#allocation2 + $0x99] sm:$0xff]
        %v677 = vld [vmem:[#allocation2 + $0xa9] sm:$0xff]
        %v678 = vld [vmem:[#allocation2 + $0xb1] sm:$0xff]
        %v679 = vld [vmem:[#allocation2 + $0xc1] sm:$0xff]
        %v680 = vld [vmem:[#allocation2 + $0xc9] sm:$0xff]
        %v681 = vld [vmem:[#allocation2 + $0xd9] sm:$0xff]
        %v682 = vld [vmem:[#allocation2 + $0xe1] sm:$0xff]
        %v683 = vld [vmem:[#allocation2 + $0xf1] sm:$0xff]
        %v684 = vld [vmem:[#allocation2 + $0xf9] sm:$0xff]
        %v685 = vld [vmem:[#allocation2 + $0x109] sm:$0xff]
        %v686 = vld [vmem:[#allocation2 + $0x111] sm:$0xff]
        %v687 = vld [vmem:[#allocation2 + $0x121] sm:$0xff]
        %v688 = vld [vmem:[#allocation2 + $0x129] sm:$0xff]
        %v689 = vld [vmem:[#allocation2 + $0x139] sm:$0xff]
        %v690 = vld [vmem:[#allocation2 + $0x141] sm:$0xff]
        %v691 = vld [vmem:[#allocation2 + $0x151] sm:$0xff]
        %v692 = vld [vmem:[#allocation2 + $0x159] sm:$0xff]
        %v693 = vld [vmem:[#allocation2 + $0x169] sm:$0xff]
        %v694 = vld [vmem:[#allocation2 + $0x171] sm:$0xff]
        %v695 = vlaneseq
        %v696 = vshrl.u32 %v695, 7
        %v697 = vsub.s32 1, %v696
        %v698 = vrot.slane %v561, %v697
        %v699 = vmul.f32 %v663, %v698
        %v700 = vmul.f32 %v664, %v698
        %v701 = vmul.f32 %v665, %v698
        %v702 = vmul.f32 %v666, %v698
        %v703 = vmul.f32 %v667, %v698
        %v704 = vmul.f32 %v668, %v698
        %v705 = vmul.f32 %v669, %v698
        %v706 = vmul.f32 %v670, %v698
        %v707 = vmul.f32 %v671, %v698
        %v708 = vmul.f32 %v672, %v698
        %v709 = vmul.f32 %v673, %v698
        %v710 = vmul.f32 %v674, %v698
        %v711 = vmul.f32 %v675, %v698
        %v712 = vmul.f32 %v676, %v698
        %v713 = vmul.f32 %v677, %v698
        %v714 = vmul.f32 %v678, %v698
        %v715 = vmul.f32 %v679, %v698
        %v716 = vmul.f32 %v680, %v698
        %v717 = vmul.f32 %v681, %v698
        %v718 = vmul.f32 %v682, %v698
        %v719 = vmul.f32 %v683, %v698
        %v720 = vmul.f32 %v684, %v698
        %v721 = vmul.f32 %v685, %v698
        %v722 = vmul.f32 %v686, %v698
        %v723 = vmul.f32 %v687, %v698
        %v724 = vmul.f32 %v688, %v698
        %v725 = vmul.f32 %v689, %v698
        %v726 = vmul.f32 %v690, %v698
        %v727 = vmul.f32 %v691, %v698
        %v728 = vmul.f32 %v692, %v698
        %v729 = vmul.f32 %v693, %v698
        %v730 = vmul.f32 %v694, %v698
        %v731 = vadd.f32 %v631, %v699
        %v732 = vadd.f32 %v632, %v700
        %v733 = vadd.f32 %v633, %v701
        %v734 = vadd.f32 %v634, %v702
        %v735 = vadd.f32 %v635, %v703
        %v736 = vadd.f32 %v636, %v704
        %v737 = vadd.f32 %v637, %v705
        %v738 = vadd.f32 %v638, %v706
        %v739 = vadd.f32 %v639, %v707
        %v740 = vadd.f32 %v640, %v708
        %v741 = vadd.f32 %v641, %v709
        %v742 = vadd.f32 %v642, %v710
        %v743 = vadd.f32 %v643, %v711
        %v744 = vadd.f32 %v644, %v712
        %v745 = vadd.f32 %v645, %v713
        %v746 = vadd.f32 %v646, %v714
        %v747 = vadd.f32 %v647, %v715
        %v748 = vadd.f32 %v648, %v716
        %v749 = vadd.f32 %v649, %v717
        %v750 = vadd.f32 %v650, %v718
        %v751 = vadd.f32 %v651, %v719
        %v752 = vadd.f32 %v652, %v720
        %v753 = vadd.f32 %v653, %v721
        %v754 = vadd.f32 %v654, %v722
        %v755 = vadd.f32 %v655, %v723
        %v756 = vadd.f32 %v656, %v724
        %v757 = vadd.f32 %v657, %v725
        %v758 = vadd.f32 %v658, %v726
        %v759 = vadd.f32 %v659, %v727
        %v760 = vadd.f32 %v660, %v728
        %v761 = vadd.f32 %v661, %v729
        %v762 = vadd.f32 %v662, %v730
        %v763 = vld [vmem:[#allocation2 + $0x2] sm:$0xff]
        %v764 = vld [vmem:[#allocation2 + $0xa] sm:$0xff]
        %v765 = vld [vmem:[#allocation2 + $0x1a] sm:$0xff]
        %v766 = vld [vmem:[#allocation2 + $0x22] sm:$0xff]
        %v767 = vld [vmem:[#allocation2 + $0x32] sm:$0xff]
        %v768 = vld [vmem:[#allocation2 + $0x3a] sm:$0xff]
        %v769 = vld [vmem:[#allocation2 + $0x4a] sm:$0xff]
        %v770 = vld [vmem:[#allocation2 + $0x52] sm:$0xff]
        %v771 = vld [vmem:[#allocation2 + $0x62] sm:$0xff]
        %v772 = vld [vmem:[#allocation2 + $0x6a] sm:$0xff]
        %v773 = vld [vmem:[#allocation2 + $0x7a] sm:$0xff]
        %v774 = vld [vmem:[#allocation2 + $0x82] sm:$0xff]
        %v775 = vld [vmem:[#allocation2 + $0x92] sm:$0xff]
        %v776 = vld [vmem:[#allocation2 + $0x9a] sm:$0xff]
        %v777 = vld [vmem:[#allocation2 + $0xaa] sm:$0xff]
        %v778 = vld [vmem:[#allocation2 + $0xb2] sm:$0xff]
        %v779 = vld [vmem:[#allocation2 + $0xc2] sm:$0xff]
        %v780 = vld [vmem:[#allocation2 + $0xca] sm:$0xff]
        %v781 = vld [vmem:[#allocation2 + $0xda] sm:$0xff]
        %v782 = vld [vmem:[#allocation2 + $0xe2] sm:$0xff]
        %v783 = vld [vmem:[#allocation2 + $0xf2] sm:$0xff]
        %v784 = vld [vmem:[#allocation2 + $0xfa] sm:$0xff]
        %v785 = vld [vmem:[#allocation2 + $0x10a] sm:$0xff]
        %v786 = vld [vmem:[#allocation2 + $0x112] sm:$0xff]
        %v787 = vld [vmem:[#allocation2 + $0x122] sm:$0xff]
        %v788 = vld [vmem:[#allocation2 + $0x12a] sm:$0xff]
        %v789 = vld [vmem:[#allocation2 + $0x13a] sm:$0xff]
        %v790 = vld [vmem:[#allocation2 + $0x142] sm:$0xff]
        %v791 = vld [vmem:[#allocation2 + $0x152] sm:$0xff]
        %v792 = vld [vmem:[#allocation2 + $0x15a] sm:$0xff]
        %v793 = vld [vmem:[#allocation2 + $0x16a] sm:$0xff]
        %v794 = vld [vmem:[#allocation2 + $0x172] sm:$0xff]
        %v795 = vlaneseq
        %v796 = vshrl.u32 %v795, 7
        %v797 = vsub.s32 2, %v796
        %v798 = vrot.slane %v561, %v797
        %v799 = vmul.f32 %v763, %v798
        %v800 = vmul.f32 %v764, %v798
        %v801 = vmul.f32 %v765, %v798
        %v802 = vmul.f32 %v766, %v798
        %v803 = vmul.f32 %v767, %v798
        %v804 = vmul.f32 %v768, %v798
        %v805 = vmul.f32 %v769, %v798
        %v806 = vmul.f32 %v770, %v798
        %v807 = vmul.f32 %v771, %v798
        %v808 = vmul.f32 %v772, %v798
        %v809 = vmul.f32 %v773, %v798
        %v810 = vmul.f32 %v774, %v798
        %v811 = vmul.f32 %v775, %v798
        %v812 = vmul.f32 %v776, %v798
        %v813 = vmul.f32 %v777, %v798
        %v814 = vmul.f32 %v778, %v798
        %v815 = vmul.f32 %v779, %v798
        %v816 = vmul.f32 %v780, %v798
        %v817 = vmul.f32 %v781, %v798
        %v818 = vmul.f32 %v782, %v798
        %v819 = vmul.f32 %v783, %v798
        %v820 = vmul.f32 %v784, %v798
        %v821 = vmul.f32 %v785, %v798
        %v822 = vmul.f32 %v786, %v798
        %v823 = vmul.f32 %v787, %v798
        %v824 = vmul.f32 %v788, %v798
        %v825 = vmul.f32 %v789, %v798
        %v826 = vmul.f32 %v790, %v798
        %v827 = vmul.f32 %v791, %v798
        %v828 = vmul.f32 %v792, %v798
        %v829 = vmul.f32 %v793, %v798
        %v830 = vmul.f32 %v794, %v798
        %v831 = vadd.f32 %v731, %v799
        %v832 = vadd.f32 %v732, %v800
        %v833 = vadd.f32 %v733, %v801
        %v834 = vadd.f32 %v734, %v802
        %v835 = vadd.f32 %v735, %v803
        %v836 = vadd.f32 %v736, %v804
        %v837 = vadd.f32 %v737, %v805
        %v838 = vadd.f32 %v738, %v806
        %v839 = vadd.f32 %v739, %v807
        %v840 = vadd.f32 %v740, %v808
        %v841 = vadd.f32 %v741, %v809
        %v842 = vadd.f32 %v742, %v810
        %v843 = vadd.f32 %v743, %v811
        %v844 = vadd.f32 %v744, %v812
        %v845 = vadd.f32 %v745, %v813
        %v846 = vadd.f32 %v746, %v814
        %v847 = vadd.f32 %v747, %v815
        %v848 = vadd.f32 %v748, %v816
        %v849 = vadd.f32 %v749, %v817
        %v850 = vadd.f32 %v750, %v818
        %v851 = vadd.f32 %v751, %v819
        %v852 = vadd.f32 %v752, %v820
        %v853 = vadd.f32 %v753, %v821
        %v854 = vadd.f32 %v754, %v822
        %v855 = vadd.f32 %v755, %v823
        %v856 = vadd.f32 %v756, %v824
        %v857 = vadd.f32 %v757, %v825
        %v858 = vadd.f32 %v758, %v826
        %v859 = vadd.f32 %v759, %v827
        %v860 = vadd.f32 %v760, %v828
        %v861 = vadd.f32 %v761, %v829
        %v862 = vadd.f32 %v762, %v830
        %v863 = vld [vmem:[%s528] sm:$0xff]
        %v864 = vld [vmem:[%s528 + $0x8] sm:$0xff]
        %v865 = vld [vmem:[%s528 + $0x18] sm:$0xff]
        %v866 = vld [vmem:[%s528 + $0x20] sm:$0xff]
        %v867 = vld [vmem:[%s528 + $0x30] sm:$0xff]
        %v868 = vld [vmem:[%s528 + $0x38] sm:$0xff]
        %v869 = vld [vmem:[%s528 + $0x48] sm:$0xff]
        %v870 = vld [vmem:[%s528 + $0x50] sm:$0xff]
        %v871 = vld [vmem:[%s528 + $0x60] sm:$0xff]
        %v872 = vld [vmem:[%s528 + $0x68] sm:$0xff]
        %v873 = vld [vmem:[%s528 + $0x78] sm:$0xff]
        %v874 = vld [vmem:[%s528 + $0x80] sm:$0xff]
        %v875 = vld [vmem:[%s528 + $0x90] sm:$0xff]
        %v876 = vld [vmem:[%s528 + $0x98] sm:$0xff]
        %v877 = vld [vmem:[%s528 + $0xa8] sm:$0xff]
        %v878 = vld [vmem:[%s528 + $0xb0] sm:$0xff]
        %v879 = vld [vmem:[%s528 + $0xc0] sm:$0xff]
        %v880 = vld [vmem:[%s528 + $0xc8] sm:$0xff]
        %v881 = vld [vmem:[%s528 + $0xd8] sm:$0xff]
        %v882 = vld [vmem:[%s528 + $0xe0] sm:$0xff]
        %v883 = vld [vmem:[%s528 + $0xf0] sm:$0xff]
        %v884 = vld [vmem:[%s528 + $0xf8] sm:$0xff]
        %v885 = vld [vmem:[%s528 + $0x108] sm:$0xff]
        %v886 = vld [vmem:[%s528 + $0x110] sm:$0xff]
        %v887 = vld [vmem:[%s528 + $0x120] sm:$0xff]
        %v888 = vld [vmem:[%s528 + $0x128] sm:$0xff]
        %v889 = vld [vmem:[%s528 + $0x138] sm:$0xff]
        %v890 = vld [vmem:[%s528 + $0x140] sm:$0xff]
        %v891 = vld [vmem:[%s528 + $0x150] sm:$0xff]
        %v892 = vld [vmem:[%s528 + $0x158] sm:$0xff]
        %v893 = vld [vmem:[%s528 + $0x168] sm:$0xff]
        %v894 = vld [vmem:[%s528 + $0x170] sm:$0xff]
        %v895 = vlaneseq
        %v896 = vshrl.u32 %v895, 7
        %v897 = vsub.s32 3, %v896
        %v898 = vrot.slane %v561, %v897
        %v899 = vmul.f32 %v863, %v898
        %v900 = vmul.f32 %v864, %v898
        %v901 = vmul.f32 %v865, %v898
        %v902 = vmul.f32 %v866, %v898
        %v903 = vmul.f32 %v867, %v898
        %v904 = vmul.f32 %v868, %v898
        %v905 = vmul.f32 %v869, %v898
        %v906 = vmul.f32 %v870, %v898
        %v907 = vmul.f32 %v871, %v898
        %v908 = vmul.f32 %v872, %v898
        %v909 = vmul.f32 %v873, %v898
        %v910 = vmul.f32 %v874, %v898
        %v911 = vmul.f32 %v875, %v898
        %v912 = vmul.f32 %v876, %v898
        %v913 = vmul.f32 %v877, %v898
        %v914 = vmul.f32 %v878, %v898
        %v915 = vmul.f32 %v879, %v898
        %v916 = vmul.f32 %v880, %v898
        %v917 = vmul.f32 %v881, %v898
        %v918 = vmul.f32 %v882, %v898
        %v919 = vmul.f32 %v883, %v898
        %v920 = vmul.f32 %v884, %v898
        %v921 = vmul.f32 %v885, %v898
        %v922 = vmul.f32 %v886, %v898
        %v923 = vmul.f32 %v887, %v898
        %v924 = vmul.f32 %v888, %v898
        %v925 = vmul.f32 %v889, %v898
        %v926 = vmul.f32 %v890, %v898
        %v927 = vmul.f32 %v891, %v898
        %v928 = vmul.f32 %v892, %v898
        %v929 = vmul.f32 %v893, %v898
        %v930 = vmul.f32 %v894, %v898
        %v931 = vadd.f32 %v831, %v899
        %v932 = vadd.f32 %v832, %v900
        %v933 = vadd.f32 %v833, %v901
        %v934 = vadd.f32 %v834, %v902
        %v935 = vadd.f32 %v835, %v903
        %v936 = vadd.f32 %v836, %v904
        %v937 = vadd.f32 %v837, %v905
        %v938 = vadd.f32 %v838, %v906
        %v939 = vadd.f32 %v839, %v907
        %v940 = vadd.f32 %v840, %v908
        %v941 = vadd.f32 %v841, %v909
        %v942 = vadd.f32 %v842, %v910
        %v943 = vadd.f32 %v843, %v911
        %v944 = vadd.f32 %v844, %v912
        %v945 = vadd.f32 %v845, %v913
        %v946 = vadd.f32 %v846, %v914
        %v947 = vadd.f32 %v847, %v915
        %v948 = vadd.f32 %v848, %v916
        %v949 = vadd.f32 %v849, %v917
        %v950 = vadd.f32 %v850, %v918
        %v951 = vadd.f32 %v851, %v919
        %v952 = vadd.f32 %v852, %v920
        %v953 = vadd.f32 %v853, %v921
        %v954 = vadd.f32 %v854, %v922
        %v955 = vadd.f32 %v855, %v923
        %v956 = vadd.f32 %v856, %v924
        %v957 = vadd.f32 %v857, %v925
        %v958 = vadd.f32 %v858, %v926
        %v959 = vadd.f32 %v859, %v927
        %v960 = vadd.f32 %v860, %v928
        %v961 = vadd.f32 %v861, %v929
        %v962 = vadd.f32 %v862, %v930
        %v963 = vld [vmem:[%s528 + $0x1] sm:$0xff]
        %v964 = vld [vmem:[%s528 + $0x9] sm:$0xff]
        %v965 = vld [vmem:[%s528 + $0x19] sm:$0xff]
        %v966 = vld [vmem:[%s528 + $0x21] sm:$0xff]
        %v967 = vld [vmem:[%s528 + $0x31] sm:$0xff]
        %v968 = vld [vmem:[%s528 + $0x39] sm:$0xff]
        %v969 = vld [vmem:[%s528 + $0x49] sm:$0xff]
        %v970 = vld [vmem:[%s528 + $0x51] sm:$0xff]
        %v971 = vld [vmem:[%s528 + $0x61] sm:$0xff]
        %v972 = vld [vmem:[%s528 + $0x69] sm:$0xff]
        %v973 = vld [vmem:[%s528 + $0x79] sm:$0xff]
        %v974 = vld [vmem:[%s528 + $0x81] sm:$0xff]
        %v975 = vld [vmem:[%s528 + $0x91] sm:$0xff]
        %v976 = vld [vmem:[%s528 + $0x99] sm:$0xff]
        %v977 = vld [vmem:[%s528 + $0xa9] sm:$0xff]
        %v978 = vld [vmem:[%s528 + $0xb1] sm:$0xff]
        %v979 = vld [vmem:[%s528 + $0xc1] sm:$0xff]
        %v980 = vld [vmem:[%s528 + $0xc9] sm:$0xff]
        %v981 = vld [vmem:[%s528 + $0xd9] sm:$0xff]
        %v982 = vld [vmem:[%s528 + $0xe1] sm:$0xff]
        %v983 = vld [vmem:[%s528 + $0xf1] sm:$0xff]
        %v984 = vld [vmem:[%s528 + $0xf9] sm:$0xff]
        %v985 = vld [vmem:[%s528 + $0x109] sm:$0xff]
        %v986 = vld [vmem:[%s528 + $0x111] sm:$0xff]
        %v987 = vld [vmem:[%s528 + $0x121] sm:$0xff]
        %v988 = vld [vmem:[%s528 + $0x129] sm:$0xff]
        %v989 = vld [vmem:[%s528 + $0x139] sm:$0xff]
        %v990 = vld [vmem:[%s528 + $0x141] sm:$0xff]
        %v991 = vld [vmem:[%s528 + $0x151] sm:$0xff]
        %v992 = vld [vmem:[%s528 + $0x159] sm:$0xff]
        %v993 = vld [vmem:[%s528 + $0x169] sm:$0xff]
        %v994 = vld [vmem:[%s528 + $0x171] sm:$0xff]
        %v995 = vlaneseq
        %v996 = vshrl.u32 %v995, 7
        %v997 = vsub.s32 4, %v996
        %v998 = vrot.slane %v561, %v997
        %v999 = vmul.f32 %v963, %v998
        %v1000 = vmul.f32 %v964, %v998
        %v1001 = vmul.f32 %v965, %v998
        %v1002 = vmul.f32 %v966, %v998
        %v1003 = vmul.f32 %v967, %v998
        %v1004 = vmul.f32 %v968, %v998
        %v1005 = vmul.f32 %v969, %v998
        %v1006 = vmul.f32 %v970, %v998
        %v1007 = vmul.f32 %v971, %v998
        %v1008 = vmul.f32 %v972, %v998
        %v1009 = vmul.f32 %v973, %v998
        %v1010 = vmul.f32 %v974, %v998
        %v1011 = vmul.f32 %v975, %v998
        %v1012 = vmul.f32 %v976, %v998
        %v1013 = vmul.f32 %v977, %v998
        %v1014 = vmul.f32 %v978, %v998
        %v1015 = vmul.f32 %v979, %v998
        %v1016 = vmul.f32 %v980, %v998
        %v1017 = vmul.f32 %v981, %v998
        %v1018 = vmul.f32 %v982, %v998
        %v1019 = vmul.f32 %v983, %v998
        %v1020 = vmul.f32 %v984, %v998
        %v1021 = vmul.f32 %v985, %v998
        %v1022 = vmul.f32 %v986, %v998
        %v1023 = vmul.f32 %v987, %v998
        %v1024 = vmul.f32 %v988, %v998
        %v1025 = vmul.f32 %v989, %v998
        %v1026 = vmul.f32 %v990, %v998
        %v1027 = vmul.f32 %v991, %v998
        %v1028 = vmul.f32 %v992, %v998
        %v1029 = vmul.f32 %v993, %v998
        %v1030 = vmul.f32 %v994, %v998
        %v1031 = vadd.f32 %v931, %v999
        %v1032 = vadd.f32 %v932, %v1000
        %v1033 = vadd.f32 %v933, %v1001
        %v1034 = vadd.f32 %v934, %v1002
        %v1035 = vadd.f32 %v935, %v1003
        %v1036 = vadd.f32 %v936, %v1004
        %v1037 = vadd.f32 %v937, %v1005
        %v1038 = vadd.f32 %v938, %v1006
        %v1039 = vadd.f32 %v939, %v1007
        %v1040 = vadd.f32 %v940, %v1008
        %v1041 = vadd.f32 %v941, %v1009
        %v1042 = vadd.f32 %v942, %v1010
        %v1043 = vadd.f32 %v943, %v1011
        %v1044 = vadd.f32 %v944, %v1012
        %v1045 = vadd.f32 %v945, %v1013
        %v1046 = vadd.f32 %v946, %v1014
        %v1047 = vadd.f32 %v947, %v1015
        %v1048 = vadd.f32 %v948, %v1016
        %v1049 = vadd.f32 %v949, %v1017
        %v1050 = vadd.f32 %v950, %v1018
        %v1051 = vadd.f32 %v951, %v1019
        %v1052 = vadd.f32 %v952, %v1020
        %v1053 = vadd.f32 %v953, %v1021
        %v1054 = vadd.f32 %v954, %v1022
        %v1055 = vadd.f32 %v955, %v1023
        %v1056 = vadd.f32 %v956, %v1024
        %v1057 = vadd.f32 %v957, %v1025
        %v1058 = vadd.f32 %v958, %v1026
        %v1059 = vadd.f32 %v959, %v1027
        %v1060 = vadd.f32 %v960, %v1028
        %v1061 = vadd.f32 %v961, %v1029
        %v1062 = vadd.f32 %v962, %v1030
        %v1063 = vld [vmem:[%s528 + $0x2] sm:$0xff]
        %v1064 = vld [vmem:[%s528 + $0xa] sm:$0xff]
        %v1065 = vld [vmem:[%s528 + $0x1a] sm:$0xff]
        %v1066 = vld [vmem:[%s528 + $0x22] sm:$0xff]
        %v1067 = vld [vmem:[%s528 + $0x32] sm:$0xff]
        %v1068 = vld [vmem:[%s528 + $0x3a] sm:$0xff]
        %v1069 = vld [vmem:[%s528 + $0x4a] sm:$0xff]
        %v1070 = vld [vmem:[%s528 + $0x52] sm:$0xff]
        %v1071 = vld [vmem:[%s528 + $0x62] sm:$0xff]
        %v1072 = vld [vmem:[%s528 + $0x6a] sm:$0xff]
        %v1073 = vld [vmem:[%s528 + $0x7a] sm:$0xff]
        %v1074 = vld [vmem:[%s528 + $0x82] sm:$0xff]
        %v1075 = vld [vmem:[%s528 + $0x92] sm:$0xff]
        %v1076 = vld [vmem:[%s528 + $0x9a] sm:$0xff]
        %v1077 = vld [vmem:[%s528 + $0xaa] sm:$0xff]
        %v1078 = vld [vmem:[%s528 + $0xb2] sm:$0xff]
        %v1079 = vld [vmem:[%s528 + $0xc2] sm:$0xff]
        %v1080 = vld [vmem:[%s528 + $0xca] sm:$0xff]
        %v1081 = vld [vmem:[%s528 + $0xda] sm:$0xff]
        %v1082 = vld [vmem:[%s528 + $0xe2] sm:$0xff]
        %v1083 = vld [vmem:[%s528 + $0xf2] sm:$0xff]
        %v1084 = vld [vmem:[%s528 + $0xfa] sm:$0xff]
        %v1085 = vld [vmem:[%s528 + $0x10a] sm:$0xff]
        %v1086 = vld [vmem:[%s528 + $0x112] sm:$0xff]
        %v1087 = vld [vmem:[%s528 + $0x122] sm:$0xff]
        %v1088 = vld [vmem:[%s528 + $0x12a] sm:$0xff]
        %v1089 = vld [vmem:[%s528 + $0x13a] sm:$0xff]
        %v1090 = vld [vmem:[%s528 + $0x142] sm:$0xff]
        %v1091 = vld [vmem:[%s528 + $0x152] sm:$0xff]
        %v1092 = vld [vmem:[%s528 + $0x15a] sm:$0xff]
        %v1093 = vld [vmem:[%s528 + $0x16a] sm:$0xff]
        %v1094 = vld [vmem:[%s528 + $0x172] sm:$0xff]
        %v1095 = vlaneseq
        %v1096 = vshrl.u32 %v1095, 7
        %v1097 = vsub.s32 5, %v1096
        %v1098 = vrot.slane %v561, %v1097
        %v1099 = vmul.f32 %v1063, %v1098
        %v1100 = vmul.f32 %v1064, %v1098
        %v1101 = vmul.f32 %v1065, %v1098
        %v1102 = vmul.f32 %v1066, %v1098
        %v1103 = vmul.f32 %v1067, %v1098
        %v1104 = vmul.f32 %v1068, %v1098
        %v1105 = vmul.f32 %v1069, %v1098
        %v1106 = vmul.f32 %v1070, %v1098
        %v1107 = vmul.f32 %v1071, %v1098
        %v1108 = vmul.f32 %v1072, %v1098
        %v1109 = vmul.f32 %v1073, %v1098
        %v1110 = vmul.f32 %v1074, %v1098
        %v1111 = vmul.f32 %v1075, %v1098
        %v1112 = vmul.f32 %v1076, %v1098
        %v1113 = vmul.f32 %v1077, %v1098
        %v1114 = vmul.f32 %v1078, %v1098
        %v1115 = vmul.f32 %v1079, %v1098
        %v1116 = vmul.f32 %v1080, %v1098
        %v1117 = vmul.f32 %v1081, %v1098
        %v1118 = vmul.f32 %v1082, %v1098
        %v1119 = vmul.f32 %v1083, %v1098
        %v1120 = vmul.f32 %v1084, %v1098
        %v1121 = vmul.f32 %v1085, %v1098
        %v1122 = vmul.f32 %v1086, %v1098
        %v1123 = vmul.f32 %v1087, %v1098
        %v1124 = vmul.f32 %v1088, %v1098
        %v1125 = vmul.f32 %v1089, %v1098
        %v1126 = vmul.f32 %v1090, %v1098
        %v1127 = vmul.f32 %v1091, %v1098
        %v1128 = vmul.f32 %v1092, %v1098
        %v1129 = vmul.f32 %v1093, %v1098
        %v1130 = vmul.f32 %v1094, %v1098
        %v1131 = vadd.f32 %v1031, %v1099
        %v1132 = vadd.f32 %v1032, %v1100
        %v1133 = vadd.f32 %v1033, %v1101
        %v1134 = vadd.f32 %v1034, %v1102
        %v1135 = vadd.f32 %v1035, %v1103
        %v1136 = vadd.f32 %v1036, %v1104
        %v1137 = vadd.f32 %v1037, %v1105
        %v1138 = vadd.f32 %v1038, %v1106
        %v1139 = vadd.f32 %v1039, %v1107
        %v1140 = vadd.f32 %v1040, %v1108
        %v1141 = vadd.f32 %v1041, %v1109
        %v1142 = vadd.f32 %v1042, %v1110
        %v1143 = vadd.f32 %v1043, %v1111
        %v1144 = vadd.f32 %v1044, %v1112
        %v1145 = vadd.f32 %v1045, %v1113
        %v1146 = vadd.f32 %v1046, %v1114
        %v1147 = vadd.f32 %v1047, %v1115
        %v1148 = vadd.f32 %v1048, %v1116
        %v1149 = vadd.f32 %v1049, %v1117
        %v1150 = vadd.f32 %v1050, %v1118
        %v1151 = vadd.f32 %v1051, %v1119
        %v1152 = vadd.f32 %v1052, %v1120
        %v1153 = vadd.f32 %v1053, %v1121
        %v1154 = vadd.f32 %v1054, %v1122
        %v1155 = vadd.f32 %v1055, %v1123
        %v1156 = vadd.f32 %v1056, %v1124
        %v1157 = vadd.f32 %v1057, %v1125
        %v1158 = vadd.f32 %v1058, %v1126
        %v1159 = vadd.f32 %v1059, %v1127
        %v1160 = vadd.f32 %v1060, %v1128
        %v1161 = vadd.f32 %v1061, %v1129
        %v1162 = vadd.f32 %v1062, %v1130
        %s1163 = scalar_lea.vmem [#allocation2], 48
        %v1164 = vld [vmem:[%s1163] sm:$0xff]
        %v1165 = vld [vmem:[%s1163 + $0x8] sm:$0xff]
        %v1166 = vld [vmem:[%s1163 + $0x18] sm:$0xff]
        %v1167 = vld [vmem:[%s1163 + $0x20] sm:$0xff]
        %v1168 = vld [vmem:[%s1163 + $0x30] sm:$0xff]
        %v1169 = vld [vmem:[%s1163 + $0x38] sm:$0xff]
        %v1170 = vld [vmem:[%s1163 + $0x48] sm:$0xff]
        %v1171 = vld [vmem:[%s1163 + $0x50] sm:$0xff]
        %v1172 = vld [vmem:[%s1163 + $0x60] sm:$0xff]
        %v1173 = vld [vmem:[%s1163 + $0x68] sm:$0xff]
        %v1174 = vld [vmem:[%s1163 + $0x78] sm:$0xff]
        %v1175 = vld [vmem:[%s1163 + $0x80] sm:$0xff]
        %v1176 = vld [vmem:[%s1163 + $0x90] sm:$0xff]
        %v1177 = vld [vmem:[%s1163 + $0x98] sm:$0xff]
        %v1178 = vld [vmem:[%s1163 + $0xa8] sm:$0xff]
        %v1179 = vld [vmem:[%s1163 + $0xb0] sm:$0xff]
        %v1180 = vld [vmem:[%s1163 + $0xc0] sm:$0xff]
        %v1181 = vld [vmem:[%s1163 + $0xc8] sm:$0xff]
        %v1182 = vld [vmem:[%s1163 + $0xd8] sm:$0xff]
        %v1183 = vld [vmem:[%s1163 + $0xe0] sm:$0xff]
        %v1184 = vld [vmem:[%s1163 + $0xf0] sm:$0xff]
        %v1185 = vld [vmem:[%s1163 + $0xf8] sm:$0xff]
        %v1186 = vld [vmem:[%s1163 + $0x108] sm:$0xff]
        %v1187 = vld [vmem:[%s1163 + $0x110] sm:$0xff]
        %v1188 = vld [vmem:[%s1163 + $0x120] sm:$0xff]
        %v1189 = vld [vmem:[%s1163 + $0x128] sm:$0xff]
        %v1190 = vld [vmem:[%s1163 + $0x138] sm:$0xff]
        %v1191 = vld [vmem:[%s1163 + $0x140] sm:$0xff]
        %v1192 = vld [vmem:[%s1163 + $0x150] sm:$0xff]
        %v1193 = vld [vmem:[%s1163 + $0x158] sm:$0xff]
        %v1194 = vld [vmem:[%s1163 + $0x168] sm:$0xff]
        %v1195 = vld [vmem:[%s1163 + $0x170] sm:$0xff]
        %v1196 = vlaneseq
        %v1197 = vshrl.u32 %v1196, 7
        %v1198 = vsub.s32 6, %v1197
        %v1199 = vrot.slane %v561, %v1198
        %v1200 = vmul.f32 %v1164, %v1199
        %v1201 = vmul.f32 %v1165, %v1199
        %v1202 = vmul.f32 %v1166, %v1199
        %v1203 = vmul.f32 %v1167, %v1199
        %v1204 = vmul.f32 %v1168, %v1199
        %v1205 = vmul.f32 %v1169, %v1199
        %v1206 = vmul.f32 %v1170, %v1199
        %v1207 = vmul.f32 %v1171, %v1199
        %v1208 = vmul.f32 %v1172, %v1199
        %v1209 = vmul.f32 %v1173, %v1199
        %v1210 = vmul.f32 %v1174, %v1199
        %v1211 = vmul.f32 %v1175, %v1199
        %v1212 = vmul.f32 %v1176, %v1199
        %v1213 = vmul.f32 %v1177, %v1199
        %v1214 = vmul.f32 %v1178, %v1199
        %v1215 = vmul.f32 %v1179, %v1199
        %v1216 = vmul.f32 %v1180, %v1199
        %v1217 = vmul.f32 %v1181, %v1199
        %v1218 = vmul.f32 %v1182, %v1199
        %v1219 = vmul.f32 %v1183, %v1199
        %v1220 = vmul.f32 %v1184, %v1199
        %v1221 = vmul.f32 %v1185, %v1199
        %v1222 = vmul.f32 %v1186, %v1199
        %v1223 = vmul.f32 %v1187, %v1199
        %v1224 = vmul.f32 %v1188, %v1199
        %v1225 = vmul.f32 %v1189, %v1199
        %v1226 = vmul.f32 %v1190, %v1199
        %v1227 = vmul.f32 %v1191, %v1199
        %v1228 = vmul.f32 %v1192, %v1199
        %v1229 = vmul.f32 %v1193, %v1199
        %v1230 = vmul.f32 %v1194, %v1199
        %v1231 = vmul.f32 %v1195, %v1199
        %v1232 = vadd.f32 %v1131, %v1200
        %v1233 = vadd.f32 %v1132, %v1201
        %v1234 = vadd.f32 %v1133, %v1202
        %v1235 = vadd.f32 %v1134, %v1203
        %v1236 = vadd.f32 %v1135, %v1204
        %v1237 = vadd.f32 %v1136, %v1205
        %v1238 = vadd.f32 %v1137, %v1206
        %v1239 = vadd.f32 %v1138, %v1207
        %v1240 = vadd.f32 %v1139, %v1208
        %v1241 = vadd.f32 %v1140, %v1209
        %v1242 = vadd.f32 %v1141, %v1210
        %v1243 = vadd.f32 %v1142, %v1211
        %v1244 = vadd.f32 %v1143, %v1212
        %v1245 = vadd.f32 %v1144, %v1213
        %v1246 = vadd.f32 %v1145, %v1214
        %v1247 = vadd.f32 %v1146, %v1215
        %v1248 = vadd.f32 %v1147, %v1216
        %v1249 = vadd.f32 %v1148, %v1217
        %v1250 = vadd.f32 %v1149, %v1218
        %v1251 = vadd.f32 %v1150, %v1219
        %v1252 = vadd.f32 %v1151, %v1220
        %v1253 = vadd.f32 %v1152, %v1221
        %v1254 = vadd.f32 %v1153, %v1222
        %v1255 = vadd.f32 %v1154, %v1223
        %v1256 = vadd.f32 %v1155, %v1224
        %v1257 = vadd.f32 %v1156, %v1225
        %v1258 = vadd.f32 %v1157, %v1226
        %v1259 = vadd.f32 %v1158, %v1227
        %v1260 = vadd.f32 %v1159, %v1228
        %v1261 = vadd.f32 %v1160, %v1229
        %v1262 = vadd.f32 %v1161, %v1230
        %v1263 = vadd.f32 %v1162, %v1231
        %v1264 = vld [vmem:[%s1163 + $0x1] sm:$0xff]
        %v1265 = vld [vmem:[%s1163 + $0x9] sm:$0xff]
        %v1266 = vld [vmem:[%s1163 + $0x19] sm:$0xff]
        %v1267 = vld [vmem:[%s1163 + $0x21] sm:$0xff]
        %v1268 = vld [vmem:[%s1163 + $0x31] sm:$0xff]
        %v1269 = vld [vmem:[%s1163 + $0x39] sm:$0xff]
        %v1270 = vld [vmem:[%s1163 + $0x49] sm:$0xff]
        %v1271 = vld [vmem:[%s1163 + $0x51] sm:$0xff]
        %v1272 = vld [vmem:[%s1163 + $0x61] sm:$0xff]
        %v1273 = vld [vmem:[%s1163 + $0x69] sm:$0xff]
        %v1274 = vld [vmem:[%s1163 + $0x79] sm:$0xff]
        %v1275 = vld [vmem:[%s1163 + $0x81] sm:$0xff]
        %v1276 = vld [vmem:[%s1163 + $0x91] sm:$0xff]
        %v1277 = vld [vmem:[%s1163 + $0x99] sm:$0xff]
        %v1278 = vld [vmem:[%s1163 + $0xa9] sm:$0xff]
        %v1279 = vld [vmem:[%s1163 + $0xb1] sm:$0xff]
        %v1280 = vld [vmem:[%s1163 + $0xc1] sm:$0xff]
        %v1281 = vld [vmem:[%s1163 + $0xc9] sm:$0xff]
        %v1282 = vld [vmem:[%s1163 + $0xd9] sm:$0xff]
        %v1283 = vld [vmem:[%s1163 + $0xe1] sm:$0xff]
        %v1284 = vld [vmem:[%s1163 + $0xf1] sm:$0xff]
        %v1285 = vld [vmem:[%s1163 + $0xf9] sm:$0xff]
        %v1286 = vld [vmem:[%s1163 + $0x109] sm:$0xff]
        %v1287 = vld [vmem:[%s1163 + $0x111] sm:$0xff]
        %v1288 = vld [vmem:[%s1163 + $0x121] sm:$0xff]
        %v1289 = vld [vmem:[%s1163 + $0x129] sm:$0xff]
        %v1290 = vld [vmem:[%s1163 + $0x139] sm:$0xff]
        %v1291 = vld [vmem:[%s1163 + $0x141] sm:$0xff]
        %v1292 = vld [vmem:[%s1163 + $0x151] sm:$0xff]
        %v1293 = vld [vmem:[%s1163 + $0x159] sm:$0xff]
        %v1294 = vld [vmem:[%s1163 + $0x169] sm:$0xff]
        %v1295 = vld [vmem:[%s1163 + $0x171] sm:$0xff]
        %v1296 = vlaneseq
        %v1297 = vshrl.u32 %v1296, 7
        %v1298 = vsub.s32 7, %v1297
        %v1299 = vrot.slane %v561, %v1298
        %v1300 = vmul.f32 %v1264, %v1299
        %v1301 = vmul.f32 %v1265, %v1299
        %v1302 = vmul.f32 %v1266, %v1299
        %v1303 = vmul.f32 %v1267, %v1299
        %v1304 = vmul.f32 %v1268, %v1299
        %v1305 = vmul.f32 %v1269, %v1299
        %v1306 = vmul.f32 %v1270, %v1299
        %v1307 = vmul.f32 %v1271, %v1299
        %v1308 = vmul.f32 %v1272, %v1299
        %v1309 = vmul.f32 %v1273, %v1299
        %v1310 = vmul.f32 %v1274, %v1299
        %v1311 = vmul.f32 %v1275, %v1299
        %v1312 = vmul.f32 %v1276, %v1299
        %v1313 = vmul.f32 %v1277, %v1299
        %v1314 = vmul.f32 %v1278, %v1299
        %v1315 = vmul.f32 %v1279, %v1299
        %v1316 = vmul.f32 %v1280, %v1299
        %v1317 = vmul.f32 %v1281, %v1299
        %v1318 = vmul.f32 %v1282, %v1299
        %v1319 = vmul.f32 %v1283, %v1299
        %v1320 = vmul.f32 %v1284, %v1299
        %v1321 = vmul.f32 %v1285, %v1299
        %v1322 = vmul.f32 %v1286, %v1299
        %v1323 = vmul.f32 %v1287, %v1299
        %v1324 = vmul.f32 %v1288, %v1299
        %v1325 = vmul.f32 %v1289, %v1299
        %v1326 = vmul.f32 %v1290, %v1299
        %v1327 = vmul.f32 %v1291, %v1299
        %v1328 = vmul.f32 %v1292, %v1299
        %v1329 = vmul.f32 %v1293, %v1299
        %v1330 = vmul.f32 %v1294, %v1299
        %v1331 = vmul.f32 %v1295, %v1299
        %v1332 = vadd.f32 %v1232, %v1300
        %v1333 = vadd.f32 %v1233, %v1301
        %v1334 = vadd.f32 %v1234, %v1302
        %v1335 = vadd.f32 %v1235, %v1303
        %v1336 = vadd.f32 %v1236, %v1304
        %v1337 = vadd.f32 %v1237, %v1305
        %v1338 = vadd.f32 %v1238, %v1306
        %v1339 = vadd.f32 %v1239, %v1307
        %v1340 = vadd.f32 %v1240, %v1308
        %v1341 = vadd.f32 %v1241, %v1309
        %v1342 = vadd.f32 %v1242, %v1310
        %v1343 = vadd.f32 %v1243, %v1311
        %v1344 = vadd.f32 %v1244, %v1312
        %v1345 = vadd.f32 %v1245, %v1313
        %v1346 = vadd.f32 %v1246, %v1314
        %v1347 = vadd.f32 %v1247, %v1315
        %v1348 = vadd.f32 %v1248, %v1316
        %v1349 = vadd.f32 %v1249, %v1317
        %v1350 = vadd.f32 %v1250, %v1318
        %v1351 = vadd.f32 %v1251, %v1319
        %v1352 = vadd.f32 %v1252, %v1320
        %v1353 = vadd.f32 %v1253, %v1321
        %v1354 = vadd.f32 %v1254, %v1322
        %v1355 = vadd.f32 %v1255, %v1323
        %v1356 = vadd.f32 %v1256, %v1324
        %v1357 = vadd.f32 %v1257, %v1325
        %v1358 = vadd.f32 %v1258, %v1326
        %v1359 = vadd.f32 %v1259, %v1327
        %v1360 = vadd.f32 %v1260, %v1328
        %v1361 = vadd.f32 %v1261, %v1329
        %v1362 = vadd.f32 %v1262, %v1330
        %v1363 = vadd.f32 %v1263, %v1331
        %v1364 = vld [vmem:[%s1163 + $0x2] sm:$0xff]
        %v1365 = vld [vmem:[%s1163 + $0xa] sm:$0xff]
        %v1366 = vld [vmem:[%s1163 + $0x1a] sm:$0xff]
        %v1367 = vld [vmem:[%s1163 + $0x22] sm:$0xff]
        %v1368 = vld [vmem:[%s1163 + $0x32] sm:$0xff]
        %v1369 = vld [vmem:[%s1163 + $0x3a] sm:$0xff]
        %v1370 = vld [vmem:[%s1163 + $0x4a] sm:$0xff]
        %v1371 = vld [vmem:[%s1163 + $0x52] sm:$0xff]
        %v1372 = vld [vmem:[%s1163 + $0x62] sm:$0xff]
        %v1373 = vld [vmem:[%s1163 + $0x6a] sm:$0xff]
        %v1374 = vld [vmem:[%s1163 + $0x7a] sm:$0xff]
        %v1375 = vld [vmem:[%s1163 + $0x82] sm:$0xff]
        %v1376 = vld [vmem:[%s1163 + $0x92] sm:$0xff]
        %v1377 = vld [vmem:[%s1163 + $0x9a] sm:$0xff]
        %v1378 = vld [vmem:[%s1163 + $0xaa] sm:$0xff]
        %v1379 = vld [vmem:[%s1163 + $0xb2] sm:$0xff]
        %v1380 = vld [vmem:[%s1163 + $0xc2] sm:$0xff]
        %v1381 = vld [vmem:[%s1163 + $0xca] sm:$0xff]
        %v1382 = vld [vmem:[%s1163 + $0xda] sm:$0xff]
        %v1383 = vld [vmem:[%s1163 + $0xe2] sm:$0xff]
        %v1384 = vld [vmem:[%s1163 + $0xf2] sm:$0xff]
        %v1385 = vld [vmem:[%s1163 + $0xfa] sm:$0xff]
        %v1386 = vld [vmem:[%s1163 + $0x10a] sm:$0xff]
        %v1387 = vld [vmem:[%s1163 + $0x112] sm:$0xff]
        %v1388 = vld [vmem:[%s1163 + $0x122] sm:$0xff]
        %v1389 = vld [vmem:[%s1163 + $0x12a] sm:$0xff]
        %v1390 = vld [vmem:[%s1163 + $0x13a] sm:$0xff]
        %v1391 = vld [vmem:[%s1163 + $0x142] sm:$0xff]
        %v1392 = vld [vmem:[%s1163 + $0x152] sm:$0xff]
        %v1393 = vld [vmem:[%s1163 + $0x15a] sm:$0xff]
        %v1394 = vld [vmem:[%s1163 + $0x16a] sm:$0xff]
        %v1395 = vld [vmem:[%s1163 + $0x172] sm:$0xff]
        %v1396 = vlaneseq
        %v1397 = vshrl.u32 %v1396, 7
        %v1398 = vsub.s32 0, %v1397
        %v1399 = vrot.slane %v562, %v1398
        %v1400 = vmul.f32 %v1364, %v1399
        %v1401 = vmul.f32 %v1365, %v1399
        %v1402 = vmul.f32 %v1366, %v1399
        %v1403 = vmul.f32 %v1367, %v1399
        %v1404 = vmul.f32 %v1368, %v1399
        %v1405 = vmul.f32 %v1369, %v1399
        %v1406 = vmul.f32 %v1370, %v1399
        %v1407 = vmul.f32 %v1371, %v1399
        %v1408 = vmul.f32 %v1372, %v1399
        %v1409 = vmul.f32 %v1373, %v1399
        %v1410 = vmul.f32 %v1374, %v1399
        %v1411 = vmul.f32 %v1375, %v1399
        %v1412 = vmul.f32 %v1376, %v1399
        %v1413 = vmul.f32 %v1377, %v1399
        %v1414 = vmul.f32 %v1378, %v1399
        %v1415 = vmul.f32 %v1379, %v1399
        %v1416 = vmul.f32 %v1380, %v1399
        %v1417 = vmul.f32 %v1381, %v1399
        %v1418 = vmul.f32 %v1382, %v1399
        %v1419 = vmul.f32 %v1383, %v1399
        %v1420 = vmul.f32 %v1384, %v1399
        %v1421 = vmul.f32 %v1385, %v1399
        %v1422 = vmul.f32 %v1386, %v1399
        %v1423 = vmul.f32 %v1387, %v1399
        %v1424 = vmul.f32 %v1388, %v1399
        %v1425 = vmul.f32 %v1389, %v1399
        %v1426 = vmul.f32 %v1390, %v1399
        %v1427 = vmul.f32 %v1391, %v1399
        %v1428 = vmul.f32 %v1392, %v1399
        %v1429 = vmul.f32 %v1393, %v1399
        %v1430 = vmul.f32 %v1394, %v1399
        %v1431 = vmul.f32 %v1395, %v1399
        %v1432 = vadd.f32 %v1332, %v1400
        %v1433 = vadd.f32 %v1333, %v1401
        %v1434 = vadd.f32 %v1334, %v1402
        %v1435 = vadd.f32 %v1335, %v1403
        %v1436 = vadd.f32 %v1336, %v1404
        %v1437 = vadd.f32 %v1337, %v1405
        %v1438 = vadd.f32 %v1338, %v1406
        %v1439 = vadd.f32 %v1339, %v1407
        %v1440 = vadd.f32 %v1340, %v1408
        %v1441 = vadd.f32 %v1341, %v1409
        %v1442 = vadd.f32 %v1342, %v1410
        %v1443 = vadd.f32 %v1343, %v1411
        %v1444 = vadd.f32 %v1344, %v1412
        %v1445 = vadd.f32 %v1345, %v1413
        %v1446 = vadd.f32 %v1346, %v1414
        %v1447 = vadd.f32 %v1347, %v1415
        %v1448 = vadd.f32 %v1348, %v1416
        %v1449 = vadd.f32 %v1349, %v1417
        %v1450 = vadd.f32 %v1350, %v1418
        %v1451 = vadd.f32 %v1351, %v1419
        %v1452 = vadd.f32 %v1352, %v1420
        %v1453 = vadd.f32 %v1353, %v1421
        %v1454 = vadd.f32 %v1354, %v1422
        %v1455 = vadd.f32 %v1355, %v1423
        %v1456 = vadd.f32 %v1356, %v1424
        %v1457 = vadd.f32 %v1357, %v1425
        %v1458 = vadd.f32 %v1358, %v1426
        %v1459 = vadd.f32 %v1359, %v1427
        %v1460 = vadd.f32 %v1360, %v1428
        %v1461 = vadd.f32 %v1361, %v1429
        %v1462 = vadd.f32 %v1362, %v1430
        %v1463 = vadd.f32 %v1363, %v1431
        %v1464 = vld [vmem:[%s2] sm:$0x1]
        %v1465 = vld [vmem:[%s3] sm:$0x1]
        %v1466 = vld [vmem:[%s4] sm:$0x1]
        %v1467 = vld [vmem:[#allocation3] sm:$0x1]
        %v1468 = vmul.f32 %v1432, %v1432
        %v1469 = vmul.f32 %v1433, %v1433
        %v1470 = vmul.f32 %v1434, %v1434
        %v1471 = vmul.f32 %v1435, %v1435
        %v1472 = vmul.f32 %v1436, %v1436
        %v1473 = vmul.f32 %v1437, %v1437
        %v1474 = vmul.f32 %v1438, %v1438
        %v1475 = vmul.f32 %v1439, %v1439
        %v1476 = vmul.f32 %v1440, %v1440
        %v1477 = vmul.f32 %v1441, %v1441
        %v1478 = vmul.f32 %v1442, %v1442
        %v1479 = vmul.f32 %v1443, %v1443
        %v1480 = vmul.f32 %v1444, %v1444
        %v1481 = vmul.f32 %v1445, %v1445
        %v1482 = vmul.f32 %v1446, %v1446
        %v1483 = vmul.f32 %v1447, %v1447
        %v1484 = vmul.f32 %v1448, %v1448
        %v1485 = vmul.f32 %v1449, %v1449
        %v1486 = vmul.f32 %v1450, %v1450
        %v1487 = vmul.f32 %v1451, %v1451
        %v1488 = vmul.f32 %v1452, %v1452
        %v1489 = vmul.f32 %v1453, %v1453
        %v1490 = vmul.f32 %v1454, %v1454
        %v1491 = vmul.f32 %v1455, %v1455
        %v1492 = vmul.f32 %v1456, %v1456
        %v1493 = vmul.f32 %v1457, %v1457
        %v1494 = vmul.f32 %v1458, %v1458
        %v1495 = vmul.f32 %v1459, %v1459
        %v1496 = vmul.f32 %v1460, %v1460
        %v1497 = vmul.f32 %v1461, %v1461
        %v1498 = vmul.f32 %v1462, %v1462
        %v1499 = vmul.f32 %v1463, %v1463
        %v1500 = vadd.f32 %v1468, %v1469
        %v1501 = vadd.f32 %v1500, %v1470
        %v1502 = vadd.f32 %v1501, %v1471
        %v1503 = vadd.f32 %v1502, %v1472
        %v1504 = vadd.f32 %v1503, %v1473
        %v1505 = vadd.f32 %v1504, %v1474
        %v1506 = vadd.f32 %v1505, %v1475
        %v1507 = vadd.f32 %v1506, %v1476
        %v1508 = vadd.f32 %v1507, %v1477
        %v1509 = vadd.f32 %v1508, %v1478
        %v1510 = vadd.f32 %v1509, %v1479
        %v1511 = vadd.f32 %v1510, %v1480
        %v1512 = vadd.f32 %v1511, %v1481
        %v1513 = vadd.f32 %v1512, %v1482
        %v1514 = vadd.f32 %v1513, %v1483
        %v1515 = vadd.f32 %v1514, %v1484
        %v1516 = vadd.f32 %v1515, %v1485
        %v1517 = vadd.f32 %v1516, %v1486
        %v1518 = vadd.f32 %v1517, %v1487
        %v1519 = vadd.f32 %v1518, %v1488
        %v1520 = vadd.f32 %v1519, %v1489
        %v1521 = vadd.f32 %v1520, %v1490
        %v1522 = vadd.f32 %v1521, %v1491
        %v1523 = vadd.f32 %v1522, %v1492
        %v1524 = vadd.f32 %v1523, %v1493
        %v1525 = vadd.f32 %v1524, %v1494
        %v1526 = vadd.f32 %v1525, %v1495
        %v1527 = vadd.f32 %v1526, %v1496
        %v1528 = vadd.f32 %v1527, %v1497
        %v1529 = vadd.f32 %v1528, %v1498
        %v1530 = vadd.f32 %v1529, %v1499
        %v1531 = vrot.slane %v1530, 4
        %v1532 = vadd.f32 %v1530, %v1531
        %v1533 = vrot.slane %v1532, 2
        %v1534 = vadd.f32 %v1532, %v1533
        %v1535 = vrot.slane %v1534, 1
        %v1536 = vadd.f32 %v1534, %v1535
        %v1537 = vrcp.pop 256.0
        %v1538 = vmul.f32 %v1536, %v1537
        %v1539 = vand.u32 2147483647, %v1467
        %1541 = vset.pattern.permute.xlu0 0
        %1542 = vperm.xlu0 %1541, %v1539
        %v1543 = vpop.permute.xlu0 %1542
        %v1545 = vlaneseq
        %v1546 = vshrl.u32 %v1545, 7
        %v1547 = vsub.s32 0, %v1546
        %v1548 = vrot.slane %v1543, %v1547
        %v1549 = vadd.f32 %v1538, %v1548
        %v1550 = vrsqrt.pop %v1549
        %v1551 = vmul.f32 %v1432, %v1550
        %v1552 = vmul.f32 %v1433, %v1550
        %v1553 = vmul.f32 %v1434, %v1550
        %v1554 = vmul.f32 %v1435, %v1550
        %v1555 = vmul.f32 %v1436, %v1550
        %v1556 = vmul.f32 %v1437, %v1550
        %v1557 = vmul.f32 %v1438, %v1550
        %v1558 = vmul.f32 %v1439, %v1550
        %v1559 = vmul.f32 %v1440, %v1550
        %v1560 = vmul.f32 %v1441, %v1550
        %v1561 = vmul.f32 %v1442, %v1550
        %v1562 = vmul.f32 %v1443, %v1550
        %v1563 = vmul.f32 %v1444, %v1550
        %v1564 = vmul.f32 %v1445, %v1550
        %v1565 = vmul.f32 %v1446, %v1550
        %v1566 = vmul.f32 %v1447, %v1550
        %v1567 = vmul.f32 %v1448, %v1550
        %v1568 = vmul.f32 %v1449, %v1550
        %v1569 = vmul.f32 %v1450, %v1550
        %v1570 = vmul.f32 %v1451, %v1550
        %v1571 = vmul.f32 %v1452, %v1550
        %v1572 = vmul.f32 %v1453, %v1550
        %v1573 = vmul.f32 %v1454, %v1550
        %v1574 = vmul.f32 %v1455, %v1550
        %v1575 = vmul.f32 %v1456, %v1550
        %v1576 = vmul.f32 %v1457, %v1550
        %v1577 = vmul.f32 %v1458, %v1550
        %v1578 = vmul.f32 %v1459, %v1550
        %v1579 = vmul.f32 %v1460, %v1550
        %v1580 = vmul.f32 %v1461, %v1550
        %v1581 = vmul.f32 %v1462, %v1550
        %v1582 = vmul.f32 %v1463, %v1550
        %v1584 = vlaneseq
        %v1585 = vshrl.u32 %v1584, 7
        %v1586 = vsub.s32 0, %v1585
        %v1587 = vrot.slane %v1464, %v1586
        %v1589 = vmul.f32 %v1587, %v1551
        %v1590 = vmul.f32 %v1587, %v1552
        %v1591 = vmul.f32 %v1587, %v1553
        %v1592 = vmul.f32 %v1587, %v1554
        %v1593 = vmul.f32 %v1587, %v1555
        %v1594 = vmul.f32 %v1587, %v1556
        %v1595 = vmul.f32 %v1587, %v1557
        %v1596 = vmul.f32 %v1587, %v1558
        %v1597 = vmul.f32 %v1587, %v1559
        %v1598 = vmul.f32 %v1587, %v1560
        %v1599 = vmul.f32 %v1587, %v1561
        %v1600 = vmul.f32 %v1587, %v1562
        %v1601 = vmul.f32 %v1587, %v1563
        %v1602 = vmul.f32 %v1587, %v1564
        %v1603 = vmul.f32 %v1587, %v1565
        %v1604 = vmul.f32 %v1587, %v1566
        %v1605 = vmul.f32 %v1587, %v1567
        %v1606 = vmul.f32 %v1587, %v1568
        %v1607 = vmul.f32 %v1587, %v1569
        %v1608 = vmul.f32 %v1587, %v1570
        %v1609 = vmul.f32 %v1587, %v1571
        %v1610 = vmul.f32 %v1587, %v1572
        %v1611 = vmul.f32 %v1587, %v1573
        %v1612 = vmul.f32 %v1587, %v1574
        %v1613 = vmul.f32 %v1587, %v1575
        %v1614 = vmul.f32 %v1587, %v1576
        %v1615 = vmul.f32 %v1587, %v1577
        %v1616 = vmul.f32 %v1587, %v1578
        %v1617 = vmul.f32 %v1587, %v1579
        %v1618 = vmul.f32 %v1587, %v1580
        %v1619 = vmul.f32 %v1587, %v1581
        %v1620 = vmul.f32 %v1587, %v1582
        %v1622 = vlaneseq
        %v1623 = vshrl.u32 %v1622, 7
        %v1624 = vsub.s32 0, %v1623
        %v1625 = vrot.slane %v1465, %v1624
        %v1627 = vadd.f32 %v1589, %v1625
        %v1628 = vadd.f32 %v1590, %v1625
        %v1629 = vadd.f32 %v1591, %v1625
        %v1630 = vadd.f32 %v1592, %v1625
        %v1631 = vadd.f32 %v1593, %v1625
        %v1632 = vadd.f32 %v1594, %v1625
        %v1633 = vadd.f32 %v1595, %v1625
        %v1634 = vadd.f32 %v1596, %v1625
        %v1635 = vadd.f32 %v1597, %v1625
        %v1636 = vadd.f32 %v1598, %v1625
        %v1637 = vadd.f32 %v1599, %v1625
        %v1638 = vadd.f32 %v1600, %v1625
        %v1639 = vadd.f32 %v1601, %v1625
        %v1640 = vadd.f32 %v1602, %v1625
        %v1641 = vadd.f32 %v1603, %v1625
        %v1642 = vadd.f32 %v1604, %v1625
        %v1643 = vadd.f32 %v1605, %v1625
        %v1644 = vadd.f32 %v1606, %v1625
        %v1645 = vadd.f32 %v1607, %v1625
        %v1646 = vadd.f32 %v1608, %v1625
        %v1647 = vadd.f32 %v1609, %v1625
        %v1648 = vadd.f32 %v1610, %v1625
        %v1649 = vadd.f32 %v1611, %v1625
        %v1650 = vadd.f32 %v1612, %v1625
        %v1651 = vadd.f32 %v1613, %v1625
        %v1652 = vadd.f32 %v1614, %v1625
        %v1653 = vadd.f32 %v1615, %v1625
        %v1654 = vadd.f32 %v1616, %v1625
        %v1655 = vadd.f32 %v1617, %v1625
        %v1656 = vadd.f32 %v1618, %v1625
        %v1657 = vadd.f32 %v1619, %v1625
        %v1658 = vadd.f32 %v1620, %v1625
        %v1660 = vlaneseq
        %v1661 = vshrl.u32 %v1660, 7
        %v1662 = vsub.s32 0, %v1661
        %v1663 = vrot.slane %v1466, %v1662
        %v1665 = vmax.f32 %v1627, %v1663
        %v1666 = vmax.f32 %v1628, %v1663
        %v1667 = vmax.f32 %v1629, %v1663
        %v1668 = vmax.f32 %v1630, %v1663
        %v1669 = vmax.f32 %v1631, %v1663
        %v1670 = vmax.f32 %v1632, %v1663
        %v1671 = vmax.f32 %v1633, %v1663
        %v1672 = vmax.f32 %v1634, %v1663
        %v1673 = vmax.f32 %v1635, %v1663
        %v1674 = vmax.f32 %v1636, %v1663
        %v1675 = vmax.f32 %v1637, %v1663
        %v1676 = vmax.f32 %v1638, %v1663
        %v1677 = vmax.f32 %v1639, %v1663
        %v1678 = vmax.f32 %v1640, %v1663
        %v1679 = vmax.f32 %v1641, %v1663
        %v1680 = vmax.f32 %v1642, %v1663
        %v1681 = vmax.f32 %v1643, %v1663
        %v1682 = vmax.f32 %v1644, %v1663
        %v1683 = vmax.f32 %v1645, %v1663
        %v1684 = vmax.f32 %v1646, %v1663
        %v1685 = vmax.f32 %v1647, %v1663
        %v1686 = vmax.f32 %v1648, %v1663
        %v1687 = vmax.f32 %v1649, %v1663
        %v1688 = vmax.f32 %v1650, %v1663
        %v1689 = vmax.f32 %v1651, %v1663
        %v1690 = vmax.f32 %v1652, %v1663
        %v1691 = vmax.f32 %v1653, %v1663
        %v1692 = vmax.f32 %v1654, %v1663
        %v1693 = vmax.f32 %v1655, %v1663
        %v1694 = vmax.f32 %v1656, %v1663
        %v1695 = vmax.f32 %v1657, %v1663
        %v1696 = vmax.f32 %v1658, %v1663
        %v1697 = vpack.c.bf16 %v1666, %v1665
        %v1698 = vpack.c.bf16 %v1668, %v1667
        %v1699 = vpack.c.bf16 %v1670, %v1669
        %v1700 = vpack.c.bf16 %v1672, %v1671
        %v1701 = vpack.c.bf16 %v1674, %v1673
        %v1702 = vpack.c.bf16 %v1676, %v1675
        %v1703 = vpack.c.bf16 %v1678, %v1677
        %v1704 = vpack.c.bf16 %v1680, %v1679
        %v1705 = vpack.c.bf16 %v1682, %v1681
        %v1706 = vpack.c.bf16 %v1684, %v1683
        %v1707 = vpack.c.bf16 %v1686, %v1685
        %v1708 = vpack.c.bf16 %v1688, %v1687
        %v1709 = vpack.c.bf16 %v1690, %v1689
        %v1710 = vpack.c.bf16 %v1692, %v1691
        %v1711 = vpack.c.bf16 %v1694, %v1693
        %v1712 = vpack.c.bf16 %v1696, %v1695
        %v1713 = vld [vmem:[%s6] sm:$0xff]
        %v1714 = vld [vmem:[%s6 + $0x8] sm:$0xff]
        %v1715 = vld [vmem:[%s6 + $0x10] sm:$0xff]
        %v1716 = vld [vmem:[%s6 + $0x18] sm:$0xff]
        %v1717 = vld [vmem:[%s6 + $0x20] sm:$0xff]
        %v1718 = vld [vmem:[%s6 + $0x28] sm:$0xff]
        %v1719 = vld [vmem:[%s6 + $0x30] sm:$0xff]
        %v1720 = vld [vmem:[%s6 + $0x38] sm:$0xff]
        %v1721 = vld [vmem:[%s6 + $0x40] sm:$0xff]
        %v1722 = vld [vmem:[%s6 + $0x48] sm:$0xff]
        %v1723 = vld [vmem:[%s6 + $0x50] sm:$0xff]
        %v1724 = vld [vmem:[%s6 + $0x58] sm:$0xff]
        %v1725 = vld [vmem:[%s6 + $0x60] sm:$0xff]
        %v1726 = vld [vmem:[%s6 + $0x68] sm:$0xff]
        %v1727 = vld [vmem:[%s6 + $0x70] sm:$0xff]
        %v1728 = vld [vmem:[%s6 + $0x78] sm:$0xff]
        %v1745 = vunpack.c.l.b16 %v1713
        %v1746 = vunpack.c.h.b16 %v1713
        %v1747 = vunpack.c.l.b16 %v1714
        %v1748 = vunpack.c.h.b16 %v1714
        %v1749 = vunpack.c.l.b16 %v1715
        %v1750 = vunpack.c.h.b16 %v1715
        %v1751 = vunpack.c.l.b16 %v1716
        %v1752 = vunpack.c.h.b16 %v1716
        %v1753 = vunpack.c.l.b16 %v1717
        %v1754 = vunpack.c.h.b16 %v1717
        %v1755 = vunpack.c.l.b16 %v1718
        %v1756 = vunpack.c.h.b16 %v1718
        %v1757 = vunpack.c.l.b16 %v1719
        %v1758 = vunpack.c.h.b16 %v1719
        %v1759 = vunpack.c.l.b16 %v1720
        %v1760 = vunpack.c.h.b16 %v1720
        %v1761 = vunpack.c.l.b16 %v1721
        %v1762 = vunpack.c.h.b16 %v1721
        %v1763 = vunpack.c.l.b16 %v1722
        %v1764 = vunpack.c.h.b16 %v1722
        %v1765 = vunpack.c.l.b16 %v1723
        %v1766 = vunpack.c.h.b16 %v1723
        %v1767 = vunpack.c.l.b16 %v1724
        %v1768 = vunpack.c.h.b16 %v1724
        %v1769 = vunpack.c.l.b16 %v1725
        %v1770 = vunpack.c.h.b16 %v1725
        %v1771 = vunpack.c.l.b16 %v1726
        %v1772 = vunpack.c.h.b16 %v1726
        %v1773 = vunpack.c.l.b16 %v1727
        %v1774 = vunpack.c.h.b16 %v1727
        %v1775 = vunpack.c.l.b16 %v1728
        %v1776 = vunpack.c.h.b16 %v1728
        %v1777 = vpack.c.b16 %v1747, %v1745
        %v1778 = vpack.c.b16 %v1748, %v1746
        %v1779 = vpack.c.b16 %v1751, %v1749
        %v1780 = vpack.c.b16 %v1752, %v1750
        %v1781 = vpack.c.b16 %v1755, %v1753
        %v1782 = vpack.c.b16 %v1756, %v1754
        %v1783 = vpack.c.b16 %v1759, %v1757
        %v1784 = vpack.c.b16 %v1760, %v1758
        %v1785 = vpack.c.b16 %v1763, %v1761
        %v1786 = vpack.c.b16 %v1764, %v1762
        %v1787 = vpack.c.b16 %v1767, %v1765
        %v1788 = vpack.c.b16 %v1768, %v1766
        %v1789 = vpack.c.b16 %v1771, %v1769
        %v1790 = vpack.c.b16 %v1772, %v1770
        %v1791 = vpack.c.b16 %v1775, %v1773
        %v1792 = vpack.c.b16 %v1776, %v1774
        %1809 = vmatprep.subr.bf16.mxu0 %v1778
        %1810 = vmatpush1.bf16.msra.mxu0 %v1777
        %1811 = vmatprep.subr.bf16.mxu0 %v1780
        %1812 = vmatpush1.bf16.msra.mxu0 %v1779
        %1813 = vmatprep.subr.bf16.mxu0 %v1782
        %1814 = vmatpush1.bf16.msra.mxu0 %v1781
        %1815 = vmatprep.subr.bf16.mxu0 %v1784
        %1816 = vmatpush1.bf16.msra.mxu0 %v1783
        %1817 = vmatprep.subr.bf16.mxu0 %v1786
        %1818 = vmatpush1.bf16.msra.mxu0 %v1785
        %1819 = vmatprep.subr.bf16.mxu0 %v1788
        %1820 = vmatpush1.bf16.msra.mxu0 %v1787
        %1821 = vmatprep.subr.bf16.mxu0 %v1790
        %1822 = vmatpush1.bf16.msra.mxu0 %v1789
        %1823 = vmatprep.subr.bf16.mxu0 %v1792
        %1824 = vmatpush1.bf16.msra.mxu0 %v1791
        %1825 = vmatprep.subr.bf16.mxu0 0
        %1826 = vmatpush1.bf16.msra.mxu0 0
        %1827 = vmatprep.subr.bf16.mxu0 0
        %1828 = vmatpush1.bf16.msra.mxu0 0
        %1829 = vmatprep.subr.bf16.mxu0 0
        %1830 = vmatpush1.bf16.msra.mxu0 0
        %1831 = vmatprep.subr.bf16.mxu0 0
        %1832 = vmatpush1.bf16.msra.mxu0 0
        %1833 = vmatprep.subr.bf16.mxu0 0
        %1834 = vmatpush1.bf16.msra.mxu0 0
        %1835 = vmatprep.subr.bf16.mxu0 0
        %1836 = vmatpush1.bf16.msra.mxu0 0
        %1837 = vmatprep.subr.bf16.mxu0 0
        %1838 = vmatpush1.bf16.msra.mxu0 0
        %1839 = vmatprep.subr.bf16.mxu0 0
        %1840 = vmatpush1.bf16.msra.mxu0 0
        %1841 = vmatprep.mubr.bf16.mxu0 0
        %1842 = vmatmul.mubr.bf16.gmra.mrb[0].mxu0 %v1697
        %v1843 = vpop.f32.mrb[0].mxu0
        %v1844 = vadd.f32 0.0, %v1843
        %v1845 = vpop.f32.mrb[0].mxu0
        %v1846 = vadd.f32 0.0, %v1845
        %v1847 = vpop.f32.mrb[0].mxu0
        %v1848 = vadd.f32 0.0, %v1847
        %v1849 = vpop.f32.mrb[0].mxu0
        %v1850 = vadd.f32 0.0, %v1849
        %1851 = vmatprep.mubr.bf16.mxu0 0
        %1852 = vmatmul.mubr.bf16.gmra.mrb[0].mxu0 %v1698
        %v1853 = vpop.f32.mrb[0].mxu0
        %v1854 = vadd.f32 0.0, %v1853
        %v1855 = vpop.f32.mrb[0].mxu0
        %v1856 = vadd.f32 0.0, %v1855
        %v1857 = vpop.f32.mrb[0].mxu0
        %v1858 = vadd.f32 0.0, %v1857
        %v1859 = vpop.f32.mrb[0].mxu0
        %v1860 = vadd.f32 0.0, %v1859
        %1861 = vmatprep.mubr.bf16.mxu0 0
        %1862 = vmatmul.mubr.bf16.gmra.mrb[0].mxu0 %v1699
        %v1863 = vpop.f32.mrb[0].mxu0
        %v1864 = vadd.f32 0.0, %v1863
        %v1865 = vpop.f32.mrb[0].mxu0
        %v1866 = vadd.f32 0.0, %v1865
        %v1867 = vpop.f32.mrb[0].mxu0
        %v1868 = vadd.f32 0.0, %v1867
        %v1869 = vpop.f32.mrb[0].mxu0
        %v1870 = vadd.f32 0.0, %v1869
        %1871 = vmatprep.mubr.bf16.mxu0 0
        %1872 = vmatmul.mubr.bf16.gmra.mrb[0].mxu0 %v1700
        %v1873 = vpop.f32.mrb[0].mxu0
        %v1874 = vadd.f32 0.0, %v1873
        %v1875 = vpop.f32.mrb[0].mxu0
        %v1876 = vadd.f32 0.0, %v1875
        %v1877 = vpop.f32.mrb[0].mxu0
        %v1878 = vadd.f32 0.0, %v1877
        %v1879 = vpop.f32.mrb[0].mxu0
        %v1880 = vadd.f32 0.0, %v1879
        %1881 = vmatprep.mubr.bf16.mxu0 0
        %1882 = vmatmul.mubr.bf16.gmra.mrb[0].mxu0 %v1701
        %v1883 = vpop.f32.mrb[0].mxu0
        %v1884 = vadd.f32 0.0, %v1883
        %v1885 = vpop.f32.mrb[0].mxu0
        %v1886 = vadd.f32 0.0, %v1885
        %v1887 = vpop.f32.mrb[0].mxu0
        %v1888 = vadd.f32 0.0, %v1887
        %v1889 = vpop.f32.mrb[0].mxu0
        %v1890 = vadd.f32 0.0, %v1889
        %1891 = vmatprep.mubr.bf16.mxu0 0
        %1892 = vmatmul.mubr.bf16.gmra.mrb[0].mxu0 %v1702
        %v1893 = vpop.f32.mrb[0].mxu0
        %v1894 = vadd.f32 0.0, %v1893
        %v1895 = vpop.f32.mrb[0].mxu0
        %v1896 = vadd.f32 0.0, %v1895
        %v1897 = vpop.f32.mrb[0].mxu0
        %v1898 = vadd.f32 0.0, %v1897
        %v1899 = vpop.f32.mrb[0].mxu0
        %v1900 = vadd.f32 0.0, %v1899
        %1901 = vmatprep.mubr.bf16.mxu0 0
        %1902 = vmatmul.mubr.bf16.gmra.mrb[0].mxu0 %v1703
        %v1903 = vpop.f32.mrb[0].mxu0
        %v1904 = vadd.f32 0.0, %v1903
        %v1905 = vpop.f32.mrb[0].mxu0
        %v1906 = vadd.f32 0.0, %v1905
        %v1907 = vpop.f32.mrb[0].mxu0
        %v1908 = vadd.f32 0.0, %v1907
        %v1909 = vpop.f32.mrb[0].mxu0
        %v1910 = vadd.f32 0.0, %v1909
        %1911 = vmatprep.mubr.bf16.mxu0 0
        %1912 = vmatmul.mubr.bf16.gmra.mrb[0].mxu0 %v1704
        %v1913 = vpop.f32.mrb[0].mxu0
        %v1914 = vadd.f32 0.0, %v1913
        %v1915 = vpop.f32.mrb[0].mxu0
        %v1916 = vadd.f32 0.0, %v1915
        %v1917 = vpop.f32.mrb[0].mxu0
        %v1918 = vadd.f32 0.0, %v1917
        %v1919 = vpop.f32.mrb[0].mxu0
        %v1920 = vadd.f32 0.0, %v1919
        %1921 = vmatprep.mubr.bf16.mxu0 0
        %1922 = vmatmul.mubr.bf16.gmra.mrb[0].mxu0 %v1705
        %v1923 = vpop.f32.mrb[0].mxu0
        %v1924 = vadd.f32 0.0, %v1923
        %v1925 = vpop.f32.mrb[0].mxu0
        %v1926 = vadd.f32 0.0, %v1925
        %v1927 = vpop.f32.mrb[0].mxu0
        %v1928 = vadd.f32 0.0, %v1927
        %v1929 = vpop.f32.mrb[0].mxu0
        %v1930 = vadd.f32 0.0, %v1929
        %1931 = vmatprep.mubr.bf16.mxu0 0
        %1932 = vmatmul.mubr.bf16.gmra.mrb[0].mxu0 %v1706
        %v1933 = vpop.f32.mrb[0].mxu0
        %v1934 = vadd.f32 0.0, %v1933
        %v1935 = vpop.f32.mrb[0].mxu0
        %v1936 = vadd.f32 0.0, %v1935
        %v1937 = vpop.f32.mrb[0].mxu0
        %v1938 = vadd.f32 0.0, %v1937
        %v1939 = vpop.f32.mrb[0].mxu0
        %v1940 = vadd.f32 0.0, %v1939
        %1941 = vmatprep.mubr.bf16.mxu0 0
        %1942 = vmatmul.mubr.bf16.gmra.mrb[0].mxu0 %v1707
        %v1943 = vpop.f32.mrb[0].mxu0
        %v1944 = vadd.f32 0.0, %v1943
        %v1945 = vpop.f32.mrb[0].mxu0
        %v1946 = vadd.f32 0.0, %v1945
        %v1947 = vpop.f32.mrb[0].mxu0
        %v1948 = vadd.f32 0.0, %v1947
        %v1949 = vpop.f32.mrb[0].mxu0
        %v1950 = vadd.f32 0.0, %v1949
        %1951 = vmatprep.mubr.bf16.mxu0 0
        %1952 = vmatmul.mubr.bf16.gmra.mrb[0].mxu0 %v1708
        %v1953 = vpop.f32.mrb[0].mxu0
        %v1954 = vadd.f32 0.0, %v1953
        %v1955 = vpop.f32.mrb[0].mxu0
        %v1956 = vadd.f32 0.0, %v1955
        %v1957 = vpop.f32.mrb[0].mxu0
        %v1958 = vadd.f32 0.0, %v1957
        %v1959 = vpop.f32.mrb[0].mxu0
        %v1960 = vadd.f32 0.0, %v1959
        %1961 = vmatprep.mubr.bf16.mxu0 0
        %1962 = vmatmul.mubr.bf16.gmra.mrb[0].mxu0 %v1709
        %v1963 = vpop.f32.mrb[0].mxu0
        %v1964 = vadd.f32 0.0, %v1963
        %v1965 = vpop.f32.mrb[0].mxu0
        %v1966 = vadd.f32 0.0, %v1965
        %v1967 = vpop.f32.mrb[0].mxu0
        %v1968 = vadd.f32 0.0, %v1967
        %v1969 = vpop.f32.mrb[0].mxu0
        %v1970 = vadd.f32 0.0, %v1969
        %1971 = vmatprep.mubr.bf16.mxu0 0
        %1972 = vmatmul.mubr.bf16.gmra.mrb[0].mxu0 %v1710
        %v1973 = vpop.f32.mrb[0].mxu0
        %v1974 = vadd.f32 0.0, %v1973
        %v1975 = vpop.f32.mrb[0].mxu0
        %v1976 = vadd.f32 0.0, %v1975
        %v1977 = vpop.f32.mrb[0].mxu0
        %v1978 = vadd.f32 0.0, %v1977
        %v1979 = vpop.f32.mrb[0].mxu0
        %v1980 = vadd.f32 0.0, %v1979
        %1981 = vmatprep.mubr.bf16.mxu0 0
        %1982 = vmatmul.mubr.bf16.gmra.mrb[0].mxu0 %v1711
        %v1983 = vpop.f32.mrb[0].mxu0
        %v1984 = vadd.f32 0.0, %v1983
        %v1985 = vpop.f32.mrb[0].mxu0
        %v1986 = vadd.f32 0.0, %v1985
        %v1987 = vpop.f32.mrb[0].mxu0
        %v1988 = vadd.f32 0.0, %v1987
        %v1989 = vpop.f32.mrb[0].mxu0
        %v1990 = vadd.f32 0.0, %v1989
        %1991 = vmatprep.mubr.bf16.mxu0 0
        %1992 = vmatmul.mubr.bf16.gmra.mrb[0].mxu0 %v1712
        %v1993 = vpop.f32.mrb[0].mxu0
        %v1994 = vadd.f32 0.0, %v1993
        %v1995 = vpop.f32.mrb[0].mxu0
        %v1996 = vadd.f32 0.0, %v1995
        %v1997 = vpop.f32.mrb[0].mxu0
        %v1998 = vadd.f32 0.0, %v1997
        %v1999 = vpop.f32.mrb[0].mxu0
        %v2000 = vadd.f32 0.0, %v1999
        %2001 = vdwg.mxu0
        %v2002 = vld [vmem:[%s7] sm:$0x3]
        %v2003 = vld [vmem:[%s8] sm:$0x3]
        %v2004 = vld [vmem:[%s9] sm:$0x3]
        %v2005 = vld [vmem:[#allocation4] sm:$0x1]
        %v2006 = vmul.f32 %v1844, %v1844
        %v2007 = vmul.f32 %v1846, %v1846
        %v2008 = vmul.f32 %v1848, %v1848
        %v2009 = vmul.f32 %v1850, %v1850
        %v2010 = vmul.f32 %v1854, %v1854
        %v2011 = vmul.f32 %v1856, %v1856
        %v2012 = vmul.f32 %v1858, %v1858
        %v2013 = vmul.f32 %v1860, %v1860
        %v2014 = vmul.f32 %v1864, %v1864
        %v2015 = vmul.f32 %v1866, %v1866
        %v2016 = vmul.f32 %v1868, %v1868
        %v2017 = vmul.f32 %v1870, %v1870
        %v2018 = vmul.f32 %v1874, %v1874
        %v2019 = vmul.f32 %v1876, %v1876
        %v2020 = vmul.f32 %v1878, %v1878
        %v2021 = vmul.f32 %v1880, %v1880
        %v2022 = vmul.f32 %v1884, %v1884
        %v2023 = vmul.f32 %v1886, %v1886
        %v2024 = vmul.f32 %v1888, %v1888
        %v2025 = vmul.f32 %v1890, %v1890
        %v2026 = vmul.f32 %v1894, %v1894
        %v2027 = vmul.f32 %v1896, %v1896
        %v2028 = vmul.f32 %v1898, %v1898
        %v2029 = vmul.f32 %v1900, %v1900
        %v2030 = vmul.f32 %v1904, %v1904
        %v2031 = vmul.f32 %v1906, %v1906
        %v2032 = vmul.f32 %v1908, %v1908
        %v2033 = vmul.f32 %v1910, %v1910
        %v2034 = vmul.f32 %v1914, %v1914
        %v2035 = vmul.f32 %v1916, %v1916
        %v2036 = vmul.f32 %v1918, %v1918
        %v2037 = vmul.f32 %v1920, %v1920
        %v2038 = vmul.f32 %v1924, %v1924
        %v2039 = vmul.f32 %v1926, %v1926
        %v2040 = vmul.f32 %v1928, %v1928
        %v2041 = vmul.f32 %v1930, %v1930
        %v2042 = vmul.f32 %v1934, %v1934
        %v2043 = vmul.f32 %v1936, %v1936
        %v2044 = vmul.f32 %v1938, %v1938
        %v2045 = vmul.f32 %v1940, %v1940
        %v2046 = vmul.f32 %v1944, %v1944
        %v2047 = vmul.f32 %v1946, %v1946
        %v2048 = vmul.f32 %v1948, %v1948
        %v2049 = vmul.f32 %v1950, %v1950
        %v2050 = vmul.f32 %v1954, %v1954
        %v2051 = vmul.f32 %v1956, %v1956
        %v2052 = vmul.f32 %v1958, %v1958
        %v2053 = vmul.f32 %v1960, %v1960
        %v2054 = vmul.f32 %v1964, %v1964
        %v2055 = vmul.f32 %v1966, %v1966
        %v2056 = vmul.f32 %v1968, %v1968
        %v2057 = vmul.f32 %v1970, %v1970
        %v2058 = vmul.f32 %v1974, %v1974
        %v2059 = vmul.f32 %v1976, %v1976
        %v2060 = vmul.f32 %v1978, %v1978
        %v2061 = vmul.f32 %v1980, %v1980
        %v2062 = vmul.f32 %v1984, %v1984
        %v2063 = vmul.f32 %v1986, %v1986
        %v2064 = vmul.f32 %v1988, %v1988
        %v2065 = vmul.f32 %v1990, %v1990
        %v2066 = vmul.f32 %v1994, %v1994
        %v2067 = vmul.f32 %v1996, %v1996
        %v2068 = vmul.f32 %v1998, %v1998
        %v2069 = vmul.f32 %v2000, %v2000
        %v2070 = vadd.f32 %v2006, %v2008
        %v2071 = vadd.f32 %v2070, %v2010
        %v2072 = vadd.f32 %v2071, %v2012
        %v2073 = vadd.f32 %v2072, %v2014
        %v2074 = vadd.f32 %v2073, %v2016
        %v2075 = vadd.f32 %v2074, %v2018
        %v2076 = vadd.f32 %v2075, %v2020
        %v2077 = vadd.f32 %v2076, %v2022
        %v2078 = vadd.f32 %v2077, %v2024
        %v2079 = vadd.f32 %v2078, %v2026
        %v2080 = vadd.f32 %v2079, %v2028
        %v2081 = vadd.f32 %v2080, %v2030
        %v2082 = vadd.f32 %v2081, %v2032
        %v2083 = vadd.f32 %v2082, %v2034
        %v2084 = vadd.f32 %v2083, %v2036
        %v2085 = vadd.f32 %v2084, %v2038
        %v2086 = vadd.f32 %v2085, %v2040
        %v2087 = vadd.f32 %v2086, %v2042
        %v2088 = vadd.f32 %v2087, %v2044
        %v2089 = vadd.f32 %v2088, %v2046
        %v2090 = vadd.f32 %v2089, %v2048
        %v2091 = vadd.f32 %v2090, %v2050
        %v2092 = vadd.f32 %v2091, %v2052
        %v2093 = vadd.f32 %v2092, %v2054
        %v2094 = vadd.f32 %v2093, %v2056
        %v2095 = vadd.f32 %v2094, %v2058
        %v2096 = vadd.f32 %v2095, %v2060
        %v2097 = vadd.f32 %v2096, %v2062
        %v2098 = vadd.f32 %v2097, %v2064
        %v2099 = vadd.f32 %v2098, %v2066
        %v2100 = vadd.f32 %v2099, %v2068
        %v2101 = vrot.slane %v2100, 4
        %v2102 = vadd.f32 %v2100, %v2101
        %v2103 = vrot.slane %v2102, 2
        %v2104 = vadd.f32 %v2102, %v2103
        %v2105 = vrot.slane %v2104, 1
        %v2106 = vadd.f32 %v2104, %v2105
        %v2107 = vadd.f32 %v2007, %v2009
        %v2108 = vadd.f32 %v2107, %v2011
        %v2109 = vadd.f32 %v2108, %v2013
        %v2110 = vadd.f32 %v2109, %v2015
        %v2111 = vadd.f32 %v2110, %v2017
        %v2112 = vadd.f32 %v2111, %v2019
        %v2113 = vadd.f32 %v2112, %v2021
        %v2114 = vadd.f32 %v2113, %v2023
        %v2115 = vadd.f32 %v2114, %v2025
        %v2116 = vadd.f32 %v2115, %v2027
        %v2117 = vadd.f32 %v2116, %v2029
        %v2118 = vadd.f32 %v2117, %v2031
        %v2119 = vadd.f32 %v2118, %v2033
        %v2120 = vadd.f32 %v2119, %v2035
        %v2121 = vadd.f32 %v2120, %v2037
        %v2122 = vadd.f32 %v2121, %v2039
        %v2123 = vadd.f32 %v2122, %v2041
        %v2124 = vadd.f32 %v2123, %v2043
        %v2125 = vadd.f32 %v2124, %v2045
        %v2126 = vadd.f32 %v2125, %v2047
        %v2127 = vadd.f32 %v2126, %v2049
        %v2128 = vadd.f32 %v2127, %v2051
        %v2129 = vadd.f32 %v2128, %v2053
        %v2130 = vadd.f32 %v2129, %v2055
        %v2131 = vadd.f32 %v2130, %v2057
        %v2132 = vadd.f32 %v2131, %v2059
        %v2133 = vadd.f32 %v2132, %v2061
        %v2134 = vadd.f32 %v2133, %v2063
        %v2135 = vadd.f32 %v2134, %v2065
        %v2136 = vadd.f32 %v2135, %v2067
        %v2137 = vadd.f32 %v2136, %v2069
        %v2138 = vrot.slane %v2137, 4
        %v2139 = vadd.f32 %v2137, %v2138
        %v2140 = vrot.slane %v2139, 2
        %v2141 = vadd.f32 %v2139, %v2140
        %v2142 = vrot.slane %v2141, 1
        %v2143 = vadd.f32 %v2141, %v2142
        %v2144 = vmul.f32 %v2106, %v1537
        %v2145 = vmul.f32 %v2143, %v1537
        %v2146 = vand.u32 2147483647, %v2005
        %2148 = vset.pattern.permute.xlu0 0
        %2149 = vperm.xlu0 %2148, %v2146
        %v2150 = vpop.permute.xlu0 %2149
        %v2152 = vlaneseq
        %v2153 = vshrl.u32 %v2152, 7
        %v2154 = vsub.s32 0, %v2153
        %v2155 = vrot.slane %v2150, %v2154
        %v2156 = vadd.f32 %v2144, %v2155
        %v2157 = vadd.f32 %v2145, %v2155
        %v2158 = vrsqrt.pop %v2156
        %v2159 = vrsqrt.pop %v2157
        %v2160 = vmul.f32 %v1844, %v2158
        %v2161 = vmul.f32 %v1846, %v2159
        %v2162 = vmul.f32 %v1848, %v2158
        %v2163 = vmul.f32 %v1850, %v2159
        %v2164 = vmul.f32 %v1854, %v2158
        %v2165 = vmul.f32 %v1856, %v2159
        %v2166 = vmul.f32 %v1858, %v2158
        %v2167 = vmul.f32 %v1860, %v2159
        %v2168 = vmul.f32 %v1864, %v2158
        %v2169 = vmul.f32 %v1866, %v2159
        %v2170 = vmul.f32 %v1868, %v2158
        %v2171 = vmul.f32 %v1870, %v2159
        %v2172 = vmul.f32 %v1874, %v2158
        %v2173 = vmul.f32 %v1876, %v2159
        %v2174 = vmul.f32 %v1878, %v2158
        %v2175 = vmul.f32 %v1880, %v2159
        %v2176 = vmul.f32 %v1884, %v2158
        %v2177 = vmul.f32 %v1886, %v2159
        %v2178 = vmul.f32 %v1888, %v2158
        %v2179 = vmul.f32 %v1890, %v2159
        %v2180 = vmul.f32 %v1894, %v2158
        %v2181 = vmul.f32 %v1896, %v2159
        %v2182 = vmul.f32 %v1898, %v2158
        %v2183 = vmul.f32 %v1900, %v2159
        %v2184 = vmul.f32 %v1904, %v2158
        %v2185 = vmul.f32 %v1906, %v2159
        %v2186 = vmul.f32 %v1908, %v2158
        %v2187 = vmul.f32 %v1910, %v2159
        %v2188 = vmul.f32 %v1914, %v2158
        %v2189 = vmul.f32 %v1916, %v2159
        %v2190 = vmul.f32 %v1918, %v2158
        %v2191 = vmul.f32 %v1920, %v2159
        %v2192 = vmul.f32 %v1924, %v2158
        %v2193 = vmul.f32 %v1926, %v2159
        %v2194 = vmul.f32 %v1928, %v2158
        %v2195 = vmul.f32 %v1930, %v2159
        %v2196 = vmul.f32 %v1934, %v2158
        %v2197 = vmul.f32 %v1936, %v2159
        %v2198 = vmul.f32 %v1938, %v2158
        %v2199 = vmul.f32 %v1940, %v2159
        %v2200 = vmul.f32 %v1944, %v2158
        %v2201 = vmul.f32 %v1946, %v2159
        %v2202 = vmul.f32 %v1948, %v2158
        %v2203 = vmul.f32 %v1950, %v2159
        %v2204 = vmul.f32 %v1954, %v2158
        %v2205 = vmul.f32 %v1956, %v2159
        %v2206 = vmul.f32 %v1958, %v2158
        %v2207 = vmul.f32 %v1960, %v2159
        %v2208 = vmul.f32 %v1964, %v2158
        %v2209 = vmul.f32 %v1966, %v2159
        %v2210 = vmul.f32 %v1968, %v2158
        %v2211 = vmul.f32 %v1970, %v2159
        %v2212 = vmul.f32 %v1974, %v2158
        %v2213 = vmul.f32 %v1976, %v2159
        %v2214 = vmul.f32 %v1978, %v2158
        %v2215 = vmul.f32 %v1980, %v2159
        %v2216 = vmul.f32 %v1984, %v2158
        %v2217 = vmul.f32 %v1986, %v2159
        %v2218 = vmul.f32 %v1988, %v2158
        %v2219 = vmul.f32 %v1990, %v2159
        %v2220 = vmul.f32 %v1994, %v2158
        %v2221 = vmul.f32 %v1996, %v2159
        %v2222 = vmul.f32 %v1998, %v2158
        %v2223 = vmul.f32 %v2000, %v2159
        %v2225 = vlaneseq
        %v2226 = vshrl.u32 %v2225, 7
        %v2227 = vsub.s32 0, %v2226
        %v2228 = vrot.slane %v2002, %v2227
        %v2229 = vlaneseq
        %v2230 = vshrl.u32 %v2229, 7
        %v2231 = vsub.s32 1, %v2230
        %v2232 = vrot.slane %v2002, %v2231
        %v2235 = vmul.f32 %v2228, %v2160
        %v2236 = vmul.f32 %v2232, %v2161
        %v2237 = vmul.f32 %v2228, %v2162
        %v2238 = vmul.f32 %v2232, %v2163
        %v2239 = vmul.f32 %v2228, %v2164
        %v2240 = vmul.f32 %v2232, %v2165
        %v2241 = vmul.f32 %v2228, %v2166
        %v2242 = vmul.f32 %v2232, %v2167
        %v2243 = vmul.f32 %v2228, %v2168
        %v2244 = vmul.f32 %v2232, %v2169
        %v2245 = vmul.f32 %v2228, %v2170
        %v2246 = vmul.f32 %v2232, %v2171
        %v2247 = vmul.f32 %v2228, %v2172
        %v2248 = vmul.f32 %v2232, %v2173
        %v2249 = vmul.f32 %v2228, %v2174
        %v2250 = vmul.f32 %v2232, %v2175
        %v2251 = vmul.f32 %v2228, %v2176
        %v2252 = vmul.f32 %v2232, %v2177
        %v2253 = vmul.f32 %v2228, %v2178
        %v2254 = vmul.f32 %v2232, %v2179
        %v2255 = vmul.f32 %v2228, %v2180
        %v2256 = vmul.f32 %v2232, %v2181
        %v2257 = vmul.f32 %v2228, %v2182
        %v2258 = vmul.f32 %v2232, %v2183
        %v2259 = vmul.f32 %v2228, %v2184
        %v2260 = vmul.f32 %v2232, %v2185
        %v2261 = vmul.f32 %v2228, %v2186
        %v2262 = vmul.f32 %v2232, %v2187
        %v2263 = vmul.f32 %v2228, %v2188
        %v2264 = vmul.f32 %v2232, %v2189
        %v2265 = vmul.f32 %v2228, %v2190
        %v2266 = vmul.f32 %v2232, %v2191
        %v2267 = vmul.f32 %v2228, %v2192
        %v2268 = vmul.f32 %v2232, %v2193
        %v2269 = vmul.f32 %v2228, %v2194
        %v2270 = vmul.f32 %v2232, %v2195
        %v2271 = vmul.f32 %v2228, %v2196
        %v2272 = vmul.f32 %v2232, %v2197
        %v2273 = vmul.f32 %v2228, %v2198
        %v2274 = vmul.f32 %v2232, %v2199
        %v2275 = vmul.f32 %v2228, %v2200
        %v2276 = vmul.f32 %v2232, %v2201
        %v2277 = vmul.f32 %v2228, %v2202
        %v2278 = vmul.f32 %v2232, %v2203
        %v2279 = vmul.f32 %v2228, %v2204
        %v2280 = vmul.f32 %v2232, %v2205
        %v2281 = vmul.f32 %v2228, %v2206
        %v2282 = vmul.f32 %v2232, %v2207
        %v2283 = vmul.f32 %v2228, %v2208
        %v2284 = vmul.f32 %v2232, %v2209
        %v2285 = vmul.f32 %v2228, %v2210
        %v2286 = vmul.f32 %v2232, %v2211
        %v2287 = vmul.f32 %v2228, %v2212
        %v2288 = vmul.f32 %v2232, %v2213
        %v2289 = vmul.f32 %v2228, %v2214
        %v2290 = vmul.f32 %v2232, %v2215
        %v2291 = vmul.f32 %v2228, %v2216
        %v2292 = vmul.f32 %v2232, %v2217
        %v2293 = vmul.f32 %v2228, %v2218
        %v2294 = vmul.f32 %v2232, %v2219
        %v2295 = vmul.f32 %v2228, %v2220
        %v2296 = vmul.f32 %v2232, %v2221
        %v2297 = vmul.f32 %v2228, %v2222
        %v2298 = vmul.f32 %v2232, %v2223
        %v2300 = vlaneseq
        %v2301 = vshrl.u32 %v2300, 7
        %v2302 = vsub.s32 0, %v2301
        %v2303 = vrot.slane %v2003, %v2302
        %v2304 = vlaneseq
        %v2305 = vshrl.u32 %v2304, 7
        %v2306 = vsub.s32 1, %v2305
        %v2307 = vrot.slane %v2003, %v2306
        %v2310 = vadd.f32 %v2235, %v2303
        %v2311 = vadd.f32 %v2236, %v2307
        %v2312 = vadd.f32 %v2237, %v2303
        %v2313 = vadd.f32 %v2238, %v2307
        %v2314 = vadd.f32 %v2239, %v2303
        %v2315 = vadd.f32 %v2240, %v2307
        %v2316 = vadd.f32 %v2241, %v2303
        %v2317 = vadd.f32 %v2242, %v2307
        %v2318 = vadd.f32 %v2243, %v2303
        %v2319 = vadd.f32 %v2244, %v2307
        %v2320 = vadd.f32 %v2245, %v2303
        %v2321 = vadd.f32 %v2246, %v2307
        %v2322 = vadd.f32 %v2247, %v2303
        %v2323 = vadd.f32 %v2248, %v2307
        %v2324 = vadd.f32 %v2249, %v2303
        %v2325 = vadd.f32 %v2250, %v2307
        %v2326 = vadd.f32 %v2251, %v2303
        %v2327 = vadd.f32 %v2252, %v2307
        %v2328 = vadd.f32 %v2253, %v2303
        %v2329 = vadd.f32 %v2254, %v2307
        %v2330 = vadd.f32 %v2255, %v2303
        %v2331 = vadd.f32 %v2256, %v2307
        %v2332 = vadd.f32 %v2257, %v2303
        %v2333 = vadd.f32 %v2258, %v2307
        %v2334 = vadd.f32 %v2259, %v2303
        %v2335 = vadd.f32 %v2260, %v2307
        %v2336 = vadd.f32 %v2261, %v2303
        %v2337 = vadd.f32 %v2262, %v2307
        %v2338 = vadd.f32 %v2263, %v2303
        %v2339 = vadd.f32 %v2264, %v2307
        %v2340 = vadd.f32 %v2265, %v2303
        %v2341 = vadd.f32 %v2266, %v2307
        %v2342 = vadd.f32 %v2267, %v2303
        %v2343 = vadd.f32 %v2268, %v2307
        %v2344 = vadd.f32 %v2269, %v2303
        %v2345 = vadd.f32 %v2270, %v2307
        %v2346 = vadd.f32 %v2271, %v2303
        %v2347 = vadd.f32 %v2272, %v2307
        %v2348 = vadd.f32 %v2273, %v2303
        %v2349 = vadd.f32 %v2274, %v2307
        %v2350 = vadd.f32 %v2275, %v2303
        %v2351 = vadd.f32 %v2276, %v2307
        %v2352 = vadd.f32 %v2277, %v2303
        %v2353 = vadd.f32 %v2278, %v2307
        %v2354 = vadd.f32 %v2279, %v2303
        %v2355 = vadd.f32 %v2280, %v2307
        %v2356 = vadd.f32 %v2281, %v2303
        %v2357 = vadd.f32 %v2282, %v2307
        %v2358 = vadd.f32 %v2283, %v2303
        %v2359 = vadd.f32 %v2284, %v2307
        %v2360 = vadd.f32 %v2285, %v2303
        %v2361 = vadd.f32 %v2286, %v2307
        %v2362 = vadd.f32 %v2287, %v2303
        %v2363 = vadd.f32 %v2288, %v2307
        %v2364 = vadd.f32 %v2289, %v2303
        %v2365 = vadd.f32 %v2290, %v2307
        %v2366 = vadd.f32 %v2291, %v2303
        %v2367 = vadd.f32 %v2292, %v2307
        %v2368 = vadd.f32 %v2293, %v2303
        %v2369 = vadd.f32 %v2294, %v2307
        %v2370 = vadd.f32 %v2295, %v2303
        %v2371 = vadd.f32 %v2296, %v2307
        %v2372 = vadd.f32 %v2297, %v2303
        %v2373 = vadd.f32 %v2298, %v2307
        %v2375 = vlaneseq
        %v2376 = vshrl.u32 %v2375, 7
        %v2377 = vsub.s32 0, %v2376
        %v2378 = vrot.slane %v2004, %v2377
        %v2379 = vlaneseq
        %v2380 = vshrl.u32 %v2379, 7
        %v2381 = vsub.s32 1, %v2380
        %v2382 = vrot.slane %v2004, %v2381
        %v2385 = vmax.f32 %v2310, %v2378
        %v2386 = vmax.f32 %v2311, %v2382
        %v2387 = vmax.f32 %v2312, %v2378
        %v2388 = vmax.f32 %v2313, %v2382
        %v2389 = vmax.f32 %v2314, %v2378
        %v2390 = vmax.f32 %v2315, %v2382
        %v2391 = vmax.f32 %v2316, %v2378
        %v2392 = vmax.f32 %v2317, %v2382
        %v2393 = vmax.f32 %v2318, %v2378
        %v2394 = vmax.f32 %v2319, %v2382
        %v2395 = vmax.f32 %v2320, %v2378
        %v2396 = vmax.f32 %v2321, %v2382
        %v2397 = vmax.f32 %v2322, %v2378
        %v2398 = vmax.f32 %v2323, %v2382
        %v2399 = vmax.f32 %v2324, %v2378
        %v2400 = vmax.f32 %v2325, %v2382
        %v2401 = vmax.f32 %v2326, %v2378
        %v2402 = vmax.f32 %v2327, %v2382
        %v2403 = vmax.f32 %v2328, %v2378
        %v2404 = vmax.f32 %v2329, %v2382
        %v2405 = vmax.f32 %v2330, %v2378
        %v2406 = vmax.f32 %v2331, %v2382
        %v2407 = vmax.f32 %v2332, %v2378
        %v2408 = vmax.f32 %v2333, %v2382
        %v2409 = vmax.f32 %v2334, %v2378
        %v2410 = vmax.f32 %v2335, %v2382
        %v2411 = vmax.f32 %v2336, %v2378
        %v2412 = vmax.f32 %v2337, %v2382
        %v2413 = vmax.f32 %v2338, %v2378
        %v2414 = vmax.f32 %v2339, %v2382
        %v2415 = vmax.f32 %v2340, %v2378
        %v2416 = vmax.f32 %v2341, %v2382
        %v2417 = vmax.f32 %v2342, %v2378
        %v2418 = vmax.f32 %v2343, %v2382
        %v2419 = vmax.f32 %v2344, %v2378
        %v2420 = vmax.f32 %v2345, %v2382
        %v2421 = vmax.f32 %v2346, %v2378
        %v2422 = vmax.f32 %v2347, %v2382
        %v2423 = vmax.f32 %v2348, %v2378
        %v2424 = vmax.f32 %v2349, %v2382
        %v2425 = vmax.f32 %v2350, %v2378
        %v2426 = vmax.f32 %v2351, %v2382
        %v2427 = vmax.f32 %v2352, %v2378
        %v2428 = vmax.f32 %v2353, %v2382
        %v2429 = vmax.f32 %v2354, %v2378
        %v2430 = vmax.f32 %v2355, %v2382
        %v2431 = vmax.f32 %v2356, %v2378
        %v2432 = vmax.f32 %v2357, %v2382
        %v2433 = vmax.f32 %v2358, %v2378
        %v2434 = vmax.f32 %v2359, %v2382
        %v2435 = vmax.f32 %v2360, %v2378
        %v2436 = vmax.f32 %v2361, %v2382
        %v2437 = vmax.f32 %v2362, %v2378
        %v2438 = vmax.f32 %v2363, %v2382
        %v2439 = vmax.f32 %v2364, %v2378
        %v2440 = vmax.f32 %v2365, %v2382
        %v2441 = vmax.f32 %v2366, %v2378
        %v2442 = vmax.f32 %v2367, %v2382
        %v2443 = vmax.f32 %v2368, %v2378
        %v2444 = vmax.f32 %v2369, %v2382
        %v2445 = vmax.f32 %v2370, %v2378
        %v2446 = vmax.f32 %v2371, %v2382
        %v2447 = vmax.f32 %v2372, %v2378
        %v2448 = vmax.f32 %v2373, %v2382
        %2449 = vst [vmem:[%s408] sm:$0xff] %v2385
        %2450 = vst [vmem:[%s408 + $0x8] sm:$0xff] %v2386
        %2451 = vst [vmem:[%s408 + $0x10] sm:$0xff] %v2387
        %2452 = vst [vmem:[%s408 + $0x18] sm:$0xff] %v2388
        %2453 = vst [vmem:[%s408 + $0x20] sm:$0xff] %v2389
        %2454 = vst [vmem:[%s408 + $0x28] sm:$0xff] %v2390
        %2455 = vst [vmem:[%s408 + $0x30] sm:$0xff] %v2391
        %2456 = vst [vmem:[%s408 + $0x38] sm:$0xff] %v2392
        %2457 = vst [vmem:[%s408 + $0x40] sm:$0xff] %v2393
        %2458 = vst [vmem:[%s408 + $0x48] sm:$0xff] %v2394
        %2459 = vst [vmem:[%s408 + $0x50] sm:$0xff] %v2395
        %2460 = vst [vmem:[%s408 + $0x58] sm:$0xff] %v2396
        %2461 = vst [vmem:[%s408 + $0x60] sm:$0xff] %v2397
        %2462 = vst [vmem:[%s408 + $0x68] sm:$0xff] %v2398
        %2463 = vst [vmem:[%s408 + $0x70] sm:$0xff] %v2399
        %2464 = vst [vmem:[%s408 + $0x78] sm:$0xff] %v2400
        %2465 = vst [vmem:[%s408 + $0x80] sm:$0xff] %v2401
        %2466 = vst [vmem:[%s408 + $0x88] sm:$0xff] %v2402
        %2467 = vst [vmem:[%s408 + $0x90] sm:$0xff] %v2403
        %2468 = vst [vmem:[%s408 + $0x98] sm:$0xff] %v2404
        %2469 = vst [vmem:[%s408 + $0xa0] sm:$0xff] %v2405
        %2470 = vst [vmem:[%s408 + $0xa8] sm:$0xff] %v2406
        %2471 = vst [vmem:[%s408 + $0xb0] sm:$0xff] %v2407
        %2472 = vst [vmem:[%s408 + $0xb8] sm:$0xff] %v2408
        %2473 = vst [vmem:[%s408 + $0xc0] sm:$0xff] %v2409
        %2474 = vst [vmem:[%s408 + $0xc8] sm:$0xff] %v2410
        %2475 = vst [vmem:[%s408 + $0xd0] sm:$0xff] %v2411
        %2476 = vst [vmem:[%s408 + $0xd8] sm:$0xff] %v2412
        %2477 = vst [vmem:[%s408 + $0xe0] sm:$0xff] %v2413
        %2478 = vst [vmem:[%s408 + $0xe8] sm:$0xff] %v2414
        %2479 = vst [vmem:[%s408 + $0xf0] sm:$0xff] %v2415
        %2480 = vst [vmem:[%s408 + $0xf8] sm:$0xff] %v2416
        %2481 = vst [vmem:[%s408 + $0x100] sm:$0xff] %v2417
        %2482 = vst [vmem:[%s408 + $0x108] sm:$0xff] %v2418
        %2483 = vst [vmem:[%s408 + $0x110] sm:$0xff] %v2419
        %2484 = vst [vmem:[%s408 + $0x118] sm:$0xff] %v2420
        %2485 = vst [vmem:[%s408 + $0x120] sm:$0xff] %v2421
        %2486 = vst [vmem:[%s408 + $0x128] sm:$0xff] %v2422
        %2487 = vst [vmem:[%s408 + $0x130] sm:$0xff] %v2423
        %2488 = vst [vmem:[%s408 + $0x138] sm:$0xff] %v2424
        %2489 = vst [vmem:[%s408 + $0x140] sm:$0xff] %v2425
        %2490 = vst [vmem:[%s408 + $0x148] sm:$0xff] %v2426
        %2491 = vst [vmem:[%s408 + $0x150] sm:$0xff] %v2427
        %2492 = vst [vmem:[%s408 + $0x158] sm:$0xff] %v2428
        %2493 = vst [vmem:[%s408 + $0x160] sm:$0xff] %v2429
        %2494 = vst [vmem:[%s408 + $0x168] sm:$0xff] %v2430
        %2495 = vst [vmem:[%s408 + $0x170] sm:$0xff] %v2431
        %2496 = vst [vmem:[%s408 + $0x178] sm:$0xff] %v2432
        %2497 = vst [vmem:[%s408 + $0x180] sm:$0xff] %v2433
        %2498 = vst [vmem:[%s408 + $0x188] sm:$0xff] %v2434
        %2499 = vst [vmem:[%s408 + $0x190] sm:$0xff] %v2435
        %2500 = vst [vmem:[%s408 + $0x198] sm:$0xff] %v2436
        %2501 = vst [vmem:[%s408 + $0x1a0] sm:$0xff] %v2437
        %2502 = vst [vmem:[%s408 + $0x1a8] sm:$0xff] %v2438
        %2503 = vst [vmem:[%s408 + $0x1b0] sm:$0xff] %v2439
        %2504 = vst [vmem:[%s408 + $0x1b8] sm:$0xff] %v2440
        %2505 = vst [vmem:[%s408 + $0x1c0] sm:$0xff] %v2441
        %2506 = vst [vmem:[%s408 + $0x1c8] sm:$0xff] %v2442
        %2507 = vst [vmem:[%s408 + $0x1d0] sm:$0xff] %v2443
        %2508 = vst [vmem:[%s408 + $0x1d8] sm:$0xff] %v2444
        %2509 = vst [vmem:[%s408 + $0x1e0] sm:$0xff] %v2445
        %2510 = vst [vmem:[%s408 + $0x1e8] sm:$0xff] %v2446
        %2511 = vst [vmem:[%s408 + $0x1f0] sm:$0xff] %v2447
        %2512 = vst [vmem:[%s408 + $0x1f8] sm:$0xff] %v2448
        %s2513 = sand.u32 %s276, 1
        %s2514 = scalar_lea.sflag [#allocation7], %s2513
        %s2515 = sand.u32 %s276, 1
        %s2516 = smul.addr %s2515, 512
        %s2517 = scalar_lea.vmem [#allocation8], %s2516
        // Predicated region
        $region69: #{sep_conv_block.1} parent=63 // pred_check
          %p2518 = pneg %p286
        $region70: #{sep_conv_block.1} parent=63 // pred_check_branch
          %2520 = sbr.rel (%p2518) target = $region72
        $region71: #{sep_conv_block.1} parent=63 // pred_region
          %s2522 = ssub.s32 8192, 8192
          %2523 = vsyncadd %s2514, %s2522
          %s2524 = smul.addr %s32, 64
          %s2525 = smul.addr %s2524, 128
          %s2526 = scalar_lea.hbm %s11, %s2525
          %s2527 = sshll.u32 %s2517, 4
          %s2528 = int_to_ptr.vmem [resolvable:$true] %s2527
          %2533 = dma.vmem_to_hbm [thread:$0]  %s2528, 8192, %s2526, %s2514, 256, 256, 16
        $region72: #{sep_conv_block.1} parent=63 // pred_fallthru
          _
      $region64: #{sep_conv_block.1} parent=5 // pred_fallthru
        _
      %p2534 = scmp.le.s32.totalorder 2, %s27
      // Predicated region
      $region73: #{sep_conv_block.1} parent=5 // pred_check
        %p2535 = pneg %p2534
      $region74: #{sep_conv_block.1} parent=5 // pred_check_branch
        %2537 = sbr.rel (%p2535) target = $region76
      $region75: #{sep_conv_block.1} parent=5 // pred_region
        %s2538 = ssub.s32 %s27, 2
        // Predicated region
        $region77: #{sep_conv_block.1} parent=75 // pred_check
          %p2539 = pneg %p292
        $region78: #{sep_conv_block.1} parent=75 // pred_check_branch
          %2541 = sbr.rel (%p2539) target = $region80
        $region79: #{sep_conv_block.1} parent=75 // pred_region
          %s2542 = sand.u32 %s277, 1
          %s2543 = scalar_lea.sflag [#allocation7], %s2542
          %s2544 = sand.u32 %s277, 1
          %s2545 = smul.addr %s2544, 512
          %s2546 = scalar_lea.vmem [#allocation8], %s2545
          %2547 = dma.done %s2543, 8192
        $region80: #{sep_conv_block.1} parent=75 // pred_fallthru
          _
      $region76: #{sep_conv_block.1} parent=5 // pred_fallthru
        _
    $region6: #{sep_conv_block.1} parent=1 // loop_footer
      %s31 = sadd.s32 1, %s27
    $region7: #{sep_conv_block.1} parent=1 // loop_footer_branch
      %26 = sbr.rel target = $region3
    $region8: #{sep_conv_block.1} parent=1 // loop_exit
      _
    %2548 = vsyncpa [#allocation6], 1
    %s2549 = scalar_lea.sflag [#allocation6], 1
    %2550 = vsyncpa %s2549, 1
    %2551 = vsyncpa [#allocation7], 1
    %s2552 = scalar_lea.sflag [#allocation7], 1
    %2553 = vsyncpa %s2552, 1

</llo_original>
